<compile_context>
chip_gen: v5e
topology: v5e:2x2
jax: 0.10.0
libtpu: 0.0.40
codegen_flags: <defaults>
</compile_context>

<pallas_src>
import jax
import jax.numpy as jnp
from jax.experimental import pallas as pl
from jax.experimental.pallas import tpu as pltpu

HIDDEN_DIM = 2 * 384          # 768, matches self._HIDDEN_DIM
HALF_DIM = HIDDEN_DIM // 2    # 384, per-input embedding dim
NUM_CLASSES = 4               # len(classes) for this synthetic run
PADDED_CLASSES = 128          # lane-dense output width
BATCH = 8                     # small batch, multiple of 8 sublanes


def classifier_kernel(x1_ref, x2_ref, w1_ref, b1_ref, w2_ref, b2_ref, o_ref):
    """Fused: (implicit concat via split-K) -> linear -> identity dropout -> linear."""
    # Inputs arrive f32; cast to bf16 at the dot (MXU native), accumulate f32.
    x1 = x1_ref[...].astype(jnp.bfloat16)          # [B, 384]
    x2 = x2_ref[...].astype(jnp.bfloat16)          # [B, 384]

    # Split-K form of cat(x1, x2) @ W1: two MXU pushes, no concat copy.
    # Static slices of the VMEM ref are free views (384 is tile-aligned).
    h = jnp.dot(x1, w1_ref[:HALF_DIM, :], preferred_element_type=jnp.float32)
    h = h + jnp.dot(x2, w1_ref[HALF_DIM:, :], preferred_element_type=jnp.float32)
    h = h + b1_ref[...]                            # [B, 768] f32

    # Dropout(0.1) is identity at inference.

    # Second linear -> logits, lane-dense padded output [B, 128].
    logits = jnp.dot(h.astype(jnp.bfloat16), w2_ref[...],
                     preferred_element_type=jnp.float32) + b2_ref[...]
    o_ref[...] = logits.astype(o_ref.dtype)


def prepare_params(w1, b1, w2, b2):
    """One-time (load-time) layout prep: transpose to [in, out], cast weights
    to bf16, pad the class dim to 128 lanes, make biases 2-D rows."""
    C = w2.shape[0]
    w1_t = jnp.asarray(w1.T, dtype=jnp.bfloat16)                 # [768, 768] bf16
    b1_r = jnp.asarray(b1, dtype=jnp.float32).reshape(1, -1)     # [1, 768]   f32

    w2_t = jnp.zeros((HIDDEN_DIM, PADDED_CLASSES), dtype=jnp.bfloat16)
    w2_t = w2_t.at[:, :C].set(jnp.asarray(w2.T, dtype=jnp.bfloat16))  # [768,128]
    b2_r = jnp.zeros((1, PADDED_CLASSES), dtype=jnp.float32)
    b2_r = b2_r.at[:, :C].set(jnp.asarray(b2, dtype=jnp.float32))     # [1, 128]
    return (w1_t, b1_r, w2_t, b2_r, C)


def custom_classifier_forward(x1, x2, params):
    """x1, x2: [B, 384] f32; params from prepare_params(). Returns [B, C] f32."""
    w1_t, b1_r, w2_t, b2_r, C = params
    B = x1.shape[0]

    full = lambda shape: pl.BlockSpec(shape, lambda: (0,) * len(shape))

    out = pl.pallas_call(
        classifier_kernel,
        out_shape=jax.ShapeDtypeStruct((B, PADDED_CLASSES), jnp.float32),
        grid=(),
        in_specs=[
            full((B, HALF_DIM)),                  # x1
            full((B, HALF_DIM)),                  # x2
            full((HIDDEN_DIM, HIDDEN_DIM)),       # w1_t (bf16)
            full((1, HIDDEN_DIM)),                # b1
            full((HIDDEN_DIM, PADDED_CLASSES)),   # w2_t (bf16, padded)
            full((1, PADDED_CLASSES)),            # b2 (padded)
        ],
        out_specs=full((B, PADDED_CLASSES)),
        compiler_params=pltpu.CompilerParams(vmem_limit_bytes=8 << 20),
    )(x1, x2, w1_t, b1_r, w2_t, b2_r)

    return out[:, :C]


def init_params(key):
    """Deterministic init mirroring the PyTorch module:
    weights ~ N(0, 0.02) in torch [out, in] layout, biases = 0."""
    k1, k2 = jax.random.split(key)
    w1 = 0.02 * jax.random.normal(k1, (HIDDEN_DIM, HIDDEN_DIM), dtype=jnp.float32)
    b1 = jnp.zeros((HIDDEN_DIM,), dtype=jnp.float32)
    w2 = 0.02 * jax.random.normal(k2, (NUM_CLASSES, HIDDEN_DIM), dtype=jnp.float32)
    b2 = jnp.zeros((NUM_CLASSES,), dtype=jnp.float32)
    return w1, b1, w2, b2


if __name__ == "__main__":
    key = jax.random.PRNGKey(0)
    kx1, kx2, kp = jax.random.split(key, 3)

    # Precomputed sentence embeddings: [B, 384] each.
    x1 = jax.random.normal(kx1, (BATCH, HALF_DIM), dtype=jnp.float32)
    x2 = jax.random.normal(kx2, (BATCH, HALF_DIM), dtype=jnp.float32)

    w1, b1, w2, b2 = init_params(kp)
    params = prepare_params(w1, b1, w2, b2)   # one-time layout/dtype prep

    out = custom_classifier_forward(x1, x2, params)
    out = jax.block_until_ready(out)

    # Reference in plain JAX using the same bf16-quantized weights the kernel
    # sees (dropout = identity at eval); f32 accumulation on both sides.
    w1_q = params[0].astype(jnp.float32)            # [768, 768] (already [in,out])
    w2_q = params[2][:, :NUM_CLASSES].astype(jnp.float32)   # [768, C]
    x_cat = jnp.concatenate([x1, x2], axis=1)
    ref = (x_cat @ w1_q + b1) @ w2_q + b2

    assert out.shape == (BATCH, NUM_CLASSES)
    assert jnp.allclose(out, ref, atol=1e-2, rtol=1e-2)

    print("KERNEL_OK")
</pallas_src>

<mosaic_0001>
module attributes {stable_mosaic.version = 11 : i64} {
  func.func @classifier_kernel(%arg0: memref<8x384xf32, #tpu.memory_space<vmem>>, %arg1: memref<8x384xf32, #tpu.memory_space<vmem>>, %arg2: memref<768x768xbf16, #tpu.memory_space<vmem>>, %arg3: memref<1x768xf32, #tpu.memory_space<vmem>>, %arg4: memref<768x128xbf16, #tpu.memory_space<vmem>>, %arg5: memref<1x128xf32, #tpu.memory_space<vmem>>, %arg6: memref<8x128xf32, #tpu.memory_space<vmem>>) attributes {dimension_semantics = [], scalar_prefetch = 0 : i64, scratch_operands = 0 : i64, tpu.core_type = #tpu.core_type<tc>} {
    %c0 = arith.constant 0 : index
    %c0_0 = arith.constant 0 : index
    %0 = vector.load %arg0[%c0, %c0_0] : memref<8x384xf32, #tpu.memory_space<vmem>>, vector<8x384xf32>
    %1 = arith.truncf %0 : vector<8x384xf32> to vector<8x384xbf16>
    %c0_1 = arith.constant 0 : index
    %c0_2 = arith.constant 0 : index
    %2 = vector.load %arg1[%c0_1, %c0_2] : memref<8x384xf32, #tpu.memory_space<vmem>>, vector<8x384xf32>
    %3 = arith.truncf %2 : vector<8x384xf32> to vector<8x384xbf16>
    %c0_3 = arith.constant 0 : index
    %c0_4 = arith.constant 0 : index
    %4 = vector.load %arg2[%c0_3, %c0_4] : memref<768x768xbf16, #tpu.memory_space<vmem>>, vector<384x768xbf16>
    %cst = arith.constant dense<0.000000e+00> : vector<8x768xf32>
    %5 = tpu.matmul %1, %4, %cst {dimension_numbers = #tpu.dot_dimension_numbers<[1], [0], [0], [1], [0, 0, 1, 1], [], []>} : vector<8x384xbf16>, vector<384x768xbf16>, vector<8x768xf32> -> vector<8x768xf32>
    %c384 = arith.constant 384 : index
    %c0_5 = arith.constant 0 : index
    %6 = vector.load %arg2[%c384, %c0_5] : memref<768x768xbf16, #tpu.memory_space<vmem>>, vector<384x768xbf16>
    %cst_6 = arith.constant dense<0.000000e+00> : vector<8x768xf32>
    %7 = tpu.matmul %3, %6, %cst_6 {dimension_numbers = #tpu.dot_dimension_numbers<[1], [0], [0], [1], [0, 0, 1, 1], [], []>} : vector<8x384xbf16>, vector<384x768xbf16>, vector<8x768xf32> -> vector<8x768xf32>
    %8 = arith.addf %5, %7 : vector<8x768xf32>
    %c0_7 = arith.constant 0 : index
    %c0_8 = arith.constant 0 : index
    %9 = vector.load %arg3[%c0_7, %c0_8] : memref<1x768xf32, #tpu.memory_space<vmem>>, vector<1x768xf32>
    %10 = vector.broadcast %9 : vector<1x768xf32> to vector<8x768xf32>
    %11 = arith.addf %8, %10 : vector<8x768xf32>
    %12 = arith.truncf %11 : vector<8x768xf32> to vector<8x768xbf16>
    %c0_9 = arith.constant 0 : index
    %c0_10 = arith.constant 0 : index
    %13 = vector.load %arg4[%c0_9, %c0_10] : memref<768x128xbf16, #tpu.memory_space<vmem>>, vector<768x128xbf16>
    %cst_11 = arith.constant dense<0.000000e+00> : vector<8x128xf32>
    %14 = tpu.matmul %12, %13, %cst_11 {dimension_numbers = #tpu.dot_dimension_numbers<[1], [0], [0], [1], [0, 0, 1, 1], [], []>} : vector<8x768xbf16>, vector<768x128xbf16>, vector<8x128xf32> -> vector<8x128xf32>
    %c0_12 = arith.constant 0 : index
    %c0_13 = arith.constant 0 : index
    %15 = vector.load %arg5[%c0_12, %c0_13] : memref<1x128xf32, #tpu.memory_space<vmem>>, vector<1x128xf32>
    %16 = vector.broadcast %15 : vector<1x128xf32> to vector<8x128xf32>
    %17 = arith.addf %14, %16 : vector<8x128xf32>
    %c0_14 = arith.constant 0 : index
    %c0_15 = arith.constant 0 : index
    %18 = vector.load %arg6[%c0_14, %c0_15] : memref<8x128xf32, #tpu.memory_space<vmem>>, vector<8x128xf32>
    tpu.vector_store %arg6[%c0_14, %c0_15], %17 {strides = array<i32>} : memref<8x128xf32, #tpu.memory_space<vmem>>, vector<8x128xf32>,
    return
  }
}

</mosaic_0001>

<llo_original>
// kernel: tpu_custom_call.1
$region0: #{tpu_custom_call.1}
  #allocation0 [shape = 'u32[]', space=smem, size = 0x4, offset = 0x4, fixed_abs, tag = 'smem constant byte address 0x4 - core index']
  #allocation1 [shape = 'u32[72,128]{1,0:T(1,128)}', space=vmem, size = 0x9000, scoped, tag = 'internal scratch']
  %s0 = inlined_call_operand.hbm [shape: f32[8,384], index: 0, kind: input, shape index: {}]
  %s1 = inlined_call_operand.hbm [shape: f32[8,384], index: 1, kind: input, shape index: {}]
  %s2 = inlined_call_operand.hbm [shape: bf16[768,768], index: 2, kind: input, shape index: {}]
  %s3 = inlined_call_operand.hbm [shape: f32[1,768], index: 3, kind: input, shape index: {}]
  %s4 = inlined_call_operand.hbm [shape: bf16[768,128], index: 4, kind: input, shape index: {}]
  %s5 = inlined_call_operand.hbm [shape: f32[1,128], index: 5, kind: input, shape index: {}]
  %s6 = inlined_call_operand.hbm [shape: f32[8,128], index: 6, kind: output, shape index: {}]
  %s7 = sld [smem:[#allocation0]]
  $region58: #{tpu_custom_call.1} parent=0
    _
  %s9 = ssub.s32 1, %s7
  %s10 = scalar_select 0, %s9, %s7
  $region1: #{tpu_custom_call.1} parent=0
    #allocation2 [shape = 'u8[12288]{0}', space=vmem, size = 0x3000, scoped, tag = 'input window, operand 0, single buffered']
    #allocation3 [shape = 's32[1]{0}', space=sflag, size = 0x4, scoped, tag = 'scoped memory for tpu_custom_call.1']
    #allocation4 [shape = 's32[1]{0}', space=sflag, size = 0x4, scoped, tag = 'scoped memory for tpu_custom_call.1']
    #allocation5 [shape = 'u8[12288]{0}', space=vmem, size = 0x3000, scoped, tag = 'input window, operand 1, single buffered']
    #allocation6 [shape = 's32[1]{0}', space=sflag, size = 0x4, scoped, tag = 'scoped memory for tpu_custom_call.1']
    #allocation7 [shape = 'u8[1179648]{0}', space=vmem, size = 0x120000, scoped, tag = 'input window, operand 2, single buffered']
    #allocation8 [shape = 'u8[3072]{0}', space=vmem, size = 0xc00, scoped, tag = 'input window, operand 3, single buffered']
    #allocation9 [shape = 's32[1]{0}', space=sflag, size = 0x4, scoped, tag = 'scoped memory for tpu_custom_call.1']
    #allocation10 [shape = 'u8[196608]{0}', space=vmem, size = 0x30000, scoped, tag = 'input window, operand 4, single buffered']
    #allocation11 [shape = 'u8[512]{0}', space=vmem, size = 0x400, scoped, tag = 'input window, operand 5, single buffered']
    #allocation12 [shape = 's32[1]{0}', space=sflag, size = 0x4, scoped, tag = 'scoped memory for tpu_custom_call.1']
    #allocation13 [shape = 'u8[4096]{0}', space=vmem, size = 0x1000, scoped, tag = 'output window, operand 0, single buffered']
    %11 = vsyncpa [#allocation3], 0
    %12 = vsyncpa [#allocation6], 0
    %13 = vsyncpa [#allocation9], 0
    %14 = vsyncpa [#allocation12], 0
    %15 = vsyncpa [#allocation4], 0
    // Predicated region
    $region2: #{tpu_custom_call.1} parent=1 // pred_check
      _
    $region3: #{tpu_custom_call.1} parent=1 // pred_check_branch
      %17 = sbr.rel (0) target = $region5
    $region4: #{tpu_custom_call.1} parent=1 // pred_region
      %19 = vsyncadd [#allocation3], 0
      %s21 = sshll.u32 %s0, 4
      %s22 = int_to_ptr.hbm [resolvable:$true] %s21
      %s23 = sshll.u32 [#allocation2], 4
      %s24 = int_to_ptr.vmem [resolvable:$true] %s23
      %26 = dma.hbm_to_vmem [thread:$0]  %s22, 384, %s24, [#allocation3]
    $region5: #{tpu_custom_call.1} parent=1 // pred_fallthru
      _
    // Predicated region
    $region6: #{tpu_custom_call.1} parent=1 // pred_check
      _
    $region7: #{tpu_custom_call.1} parent=1 // pred_check_branch
      %28 = sbr.rel (0) target = $region9
    $region8: #{tpu_custom_call.1} parent=1 // pred_region
      %30 = vsyncadd [#allocation6], 0
      %s32 = sshll.u32 %s1, 4
      %s33 = int_to_ptr.hbm [resolvable:$true] %s32
      %s34 = sshll.u32 [#allocation5], 4
      %s35 = int_to_ptr.vmem [resolvable:$true] %s34
      %37 = dma.hbm_to_vmem [thread:$0]  %s33, 384, %s35, [#allocation6]
    $region9: #{tpu_custom_call.1} parent=1 // pred_fallthru
      _
    // Predicated region
    $region10: #{tpu_custom_call.1} parent=1 // pred_check
      _
    $region11: #{tpu_custom_call.1} parent=1 // pred_check_branch
      %39 = sbr.rel (0) target = $region13
    $region12: #{tpu_custom_call.1} parent=1 // pred_region
      %41 = vsyncadd [#allocation6], 0
      %s42 = sshll.u32 %s2, 4
      %s43 = int_to_ptr.hbm [resolvable:$true] %s42
      %s44 = sshll.u32 [#allocation7], 4
      %s45 = int_to_ptr.vmem [resolvable:$true] %s44
      %50 = dma.hbm_to_vmem [thread:$0]  %s43, 36864, %s45, [#allocation6], 384, 384, 24
    $region13: #{tpu_custom_call.1} parent=1 // pred_fallthru
      _
    // Predicated region
    $region14: #{tpu_custom_call.1} parent=1 // pred_check
      _
    $region15: #{tpu_custom_call.1} parent=1 // pred_check_branch
      %52 = sbr.rel (0) target = $region17
    $region16: #{tpu_custom_call.1} parent=1 // pred_region
      %54 = vsyncadd [#allocation9], 0
      %s56 = sshll.u32 %s3, 4
      %s57 = int_to_ptr.hbm [resolvable:$true] %s56
      %s58 = sshll.u32 [#allocation8], 4
      %s59 = int_to_ptr.vmem [resolvable:$true] %s58
      %61 = dma.hbm_to_vmem [thread:$0]  %s57, 96, %s59, [#allocation9]
    $region17: #{tpu_custom_call.1} parent=1 // pred_fallthru
      _
    // Predicated region
    $region18: #{tpu_custom_call.1} parent=1 // pred_check
      _
    $region19: #{tpu_custom_call.1} parent=1 // pred_check_branch
      %63 = sbr.rel (0) target = $region21
    $region20: #{tpu_custom_call.1} parent=1 // pred_region
      %65 = vsyncadd [#allocation9], 0
      %s66 = sshll.u32 %s4, 4
      %s67 = int_to_ptr.hbm [resolvable:$true] %s66
      %s68 = sshll.u32 [#allocation10], 4
      %s69 = int_to_ptr.vmem [resolvable:$true] %s68
      %74 = dma.hbm_to_vmem [thread:$0]  %s67, 6144, %s69, [#allocation9], 64, 64, 4
    $region21: #{tpu_custom_call.1} parent=1 // pred_fallthru
      _
    // Predicated region
    $region22: #{tpu_custom_call.1} parent=1 // pred_check
      _
    $region23: #{tpu_custom_call.1} parent=1 // pred_check_branch
      %76 = sbr.rel (0) target = $region25
    $region24: #{tpu_custom_call.1} parent=1 // pred_region
      %78 = vsyncadd [#allocation12], 0
      %s80 = sshll.u32 %s5, 4
      %s81 = int_to_ptr.hbm [resolvable:$true] %s80
      %s82 = sshll.u32 [#allocation11], 4
      %s83 = int_to_ptr.vmem [resolvable:$true] %s82
      %85 = dma.hbm_to_vmem [thread:$0]  %s81, 16, %s83, [#allocation12]
    $region25: #{tpu_custom_call.1} parent=1 // pred_fallthru
      _
    // Predicated region
    $region26: #{tpu_custom_call.1} parent=1 // pred_check
      _
    $region27: #{tpu_custom_call.1} parent=1 // pred_check_branch
      %87 = sbr.rel (0) target = $region29
    $region28: #{tpu_custom_call.1} parent=1 // pred_region
      %89 = dma.done [#allocation3], 384
    $region29: #{tpu_custom_call.1} parent=1 // pred_fallthru
      _
    // Predicated region
    $region30: #{tpu_custom_call.1} parent=1 // pred_check
      _
    $region31: #{tpu_custom_call.1} parent=1 // pred_check_branch
      %91 = sbr.rel (0) target = $region33
    $region32: #{tpu_custom_call.1} parent=1 // pred_region
      %93 = dma.done [#allocation6], 384
    $region33: #{tpu_custom_call.1} parent=1 // pred_fallthru
      _
    // Predicated region
    $region34: #{tpu_custom_call.1} parent=1 // pred_check
      _
    $region35: #{tpu_custom_call.1} parent=1 // pred_check_branch
      %95 = sbr.rel (0) target = $region37
    $region36: #{tpu_custom_call.1} parent=1 // pred_region
      %97 = dma.done [#allocation6], 36864
    $region37: #{tpu_custom_call.1} parent=1 // pred_fallthru
      _
    // Predicated region
    $region38: #{tpu_custom_call.1} parent=1 // pred_check
      _
    $region39: #{tpu_custom_call.1} parent=1 // pred_check_branch
      %99 = sbr.rel (0) target = $region41
    $region40: #{tpu_custom_call.1} parent=1 // pred_region
      %101 = dma.done [#allocation9], 96
    $region41: #{tpu_custom_call.1} parent=1 // pred_fallthru
      _
    // Predicated region
    $region42: #{tpu_custom_call.1} parent=1 // pred_check
      _
    $region43: #{tpu_custom_call.1} parent=1 // pred_check_branch
      %103 = sbr.rel (0) target = $region45
    $region44: #{tpu_custom_call.1} parent=1 // pred_region
      %105 = dma.done [#allocation9], 6144
    $region45: #{tpu_custom_call.1} parent=1 // pred_fallthru
      _
    // Predicated region
    $region46: #{tpu_custom_call.1} parent=1 // pred_check
      _
    $region47: #{tpu_custom_call.1} parent=1 // pred_check_branch
      %107 = sbr.rel (0) target = $region49
    $region48: #{tpu_custom_call.1} parent=1 // pred_region
      %109 = dma.done [#allocation12], 16
    $region49: #{tpu_custom_call.1} parent=1 // pred_fallthru
      _
    %v110 = vld [vmem:[#allocation2] sm:$0xff]
    %v111 = vld [vmem:[#allocation2 + $0x8] sm:$0xff]
    %v112 = vld [vmem:[#allocation2 + $0x10] sm:$0xff]
    %v113 = vpack.c.bf16 %v110, %v110
    %v114 = vpack.c.bf16 %v111, %v111
    %v115 = vpack.c.bf16 %v112, %v112
    %v116 = vld [vmem:[#allocation5] sm:$0xff]
    %v117 = vld [vmem:[#allocation5 + $0x8] sm:$0xff]
    %v118 = vld [vmem:[#allocation5 + $0x10] sm:$0xff]
    %v119 = vpack.c.bf16 %v116, %v116
    %v120 = vpack.c.bf16 %v117, %v117
    %v121 = vpack.c.bf16 %v118, %v118
    %v122 = vld [vmem:[#allocation7] sm:$0xff]
    %v123 = vld [vmem:[#allocation7 + $0x8] sm:$0xff]
    %v124 = vld [vmem:[#allocation7 + $0x10] sm:$0xff]
    %v125 = vld [vmem:[#allocation7 + $0x18] sm:$0xff]
    %v126 = vld [vmem:[#allocation7 + $0x20] sm:$0xff]
    %v127 = vld [vmem:[#allocation7 + $0x28] sm:$0xff]
    %v128 = vld [vmem:[#allocation7 + $0x30] sm:$0xff]
    %v129 = vld [vmem:[#allocation7 + $0x38] sm:$0xff]
    %v130 = vld [vmem:[#allocation7 + $0x40] sm:$0xff]
    %v131 = vld [vmem:[#allocation7 + $0x48] sm:$0xff]
    %v132 = vld [vmem:[#allocation7 + $0x50] sm:$0xff]
    %v133 = vld [vmem:[#allocation7 + $0x58] sm:$0xff]
    %v134 = vld [vmem:[#allocation7 + $0x60] sm:$0xff]
    %v135 = vld [vmem:[#allocation7 + $0x68] sm:$0xff]
    %v136 = vld [vmem:[#allocation7 + $0x70] sm:$0xff]
    %v137 = vld [vmem:[#allocation7 + $0x78] sm:$0xff]
    %v138 = vld [vmem:[#allocation7 + $0x80] sm:$0xff]
    %v139 = vld [vmem:[#allocation7 + $0x88] sm:$0xff]
    %v140 = vld [vmem:[#allocation7 + $0x90] sm:$0xff]
    %v141 = vld [vmem:[#allocation7 + $0x98] sm:$0xff]
    %v142 = vld [vmem:[#allocation7 + $0xa0] sm:$0xff]
    %v143 = vld [vmem:[#allocation7 + $0xa8] sm:$0xff]
    %v144 = vld [vmem:[#allocation7 + $0xb0] sm:$0xff]
    %v145 = vld [vmem:[#allocation7 + $0xb8] sm:$0xff]
    %v146 = vld [vmem:[#allocation7 + $0xc0] sm:$0xff]
    %v147 = vld [vmem:[#allocation7 + $0xc8] sm:$0xff]
    %v148 = vld [vmem:[#allocation7 + $0xd0] sm:$0xff]
    %v149 = vld [vmem:[#allocation7 + $0xd8] sm:$0xff]
    %v150 = vld [vmem:[#allocation7 + $0xe0] sm:$0xff]
    %v151 = vld [vmem:[#allocation7 + $0xe8] sm:$0xff]
    %v152 = vld [vmem:[#allocation7 + $0xf0] sm:$0xff]
    %v153 = vld [vmem:[#allocation7 + $0xf8] sm:$0xff]
    %v154 = vld [vmem:[#allocation7 + $0x100] sm:$0xff]
    %v155 = vld [vmem:[#allocation7 + $0x108] sm:$0xff]
    %v156 = vld [vmem:[#allocation7 + $0x110] sm:$0xff]
    %v157 = vld [vmem:[#allocation7 + $0x118] sm:$0xff]
    %v158 = vld [vmem:[#allocation7 + $0x120] sm:$0xff]
    %v159 = vld [vmem:[#allocation7 + $0x128] sm:$0xff]
    %v160 = vld [vmem:[#allocation7 + $0x130] sm:$0xff]
    %v161 = vld [vmem:[#allocation7 + $0x138] sm:$0xff]
    %v162 = vld [vmem:[#allocation7 + $0x140] sm:$0xff]
    %v163 = vld [vmem:[#allocation7 + $0x148] sm:$0xff]
    %v164 = vld [vmem:[#allocation7 + $0x150] sm:$0xff]
    %v165 = vld [vmem:[#allocation7 + $0x158] sm:$0xff]
    %v166 = vld [vmem:[#allocation7 + $0x160] sm:$0xff]
    %v167 = vld [vmem:[#allocation7 + $0x168] sm:$0xff]
    %v168 = vld [vmem:[#allocation7 + $0x170] sm:$0xff]
    %v169 = vld [vmem:[#allocation7 + $0x178] sm:$0xff]
    %v170 = vld [vmem:[#allocation7 + $0x180] sm:$0xff]
    %v171 = vld [vmem:[#allocation7 + $0x188] sm:$0xff]
    %v172 = vld [vmem:[#allocation7 + $0x190] sm:$0xff]
    %v173 = vld [vmem:[#allocation7 + $0x198] sm:$0xff]
    %v174 = vld [vmem:[#allocation7 + $0x1a0] sm:$0xff]
    %v175 = vld [vmem:[#allocation7 + $0x1a8] sm:$0xff]
    %v176 = vld [vmem:[#allocation7 + $0x1b0] sm:$0xff]
    %v177 = vld [vmem:[#allocation7 + $0x1b8] sm:$0xff]
    %v178 = vld [vmem:[#allocation7 + $0x1c0] sm:$0xff]
    %v179 = vld [vmem:[#allocation7 + $0x1c8] sm:$0xff]
    %v180 = vld [vmem:[#allocation7 + $0x1d0] sm:$0xff]
    %v181 = vld [vmem:[#allocation7 + $0x1d8] sm:$0xff]
    %v182 = vld [vmem:[#allocation7 + $0x1e0] sm:$0xff]
    %v183 = vld [vmem:[#allocation7 + $0x1e8] sm:$0xff]
    %v184 = vld [vmem:[#allocation7 + $0x1f0] sm:$0xff]
    %v185 = vld [vmem:[#allocation7 + $0x1f8] sm:$0xff]
    %v186 = vld [vmem:[#allocation7 + $0x200] sm:$0xff]
    %v187 = vld [vmem:[#allocation7 + $0x208] sm:$0xff]
    %v188 = vld [vmem:[#allocation7 + $0x210] sm:$0xff]
    %v189 = vld [vmem:[#allocation7 + $0x218] sm:$0xff]
    %v190 = vld [vmem:[#allocation7 + $0x220] sm:$0xff]
    %v191 = vld [vmem:[#allocation7 + $0x228] sm:$0xff]
    %v192 = vld [vmem:[#allocation7 + $0x230] sm:$0xff]
    %v193 = vld [vmem:[#allocation7 + $0x238] sm:$0xff]
    %v194 = vld [vmem:[#allocation7 + $0x240] sm:$0xff]
    %v195 = vld [vmem:[#allocation7 + $0x248] sm:$0xff]
    %v196 = vld [vmem:[#allocation7 + $0x250] sm:$0xff]
    %v197 = vld [vmem:[#allocation7 + $0x258] sm:$0xff]
    %v198 = vld [vmem:[#allocation7 + $0x260] sm:$0xff]
    %v199 = vld [vmem:[#allocation7 + $0x268] sm:$0xff]
    %v200 = vld [vmem:[#allocation7 + $0x270] sm:$0xff]
    %v201 = vld [vmem:[#allocation7 + $0x278] sm:$0xff]
    %v202 = vld [vmem:[#allocation7 + $0x280] sm:$0xff]
    %v203 = vld [vmem:[#allocation7 + $0x288] sm:$0xff]
    %v204 = vld [vmem:[#allocation7 + $0x290] sm:$0xff]
    %v205 = vld [vmem:[#allocation7 + $0x298] sm:$0xff]
    %v206 = vld [vmem:[#allocation7 + $0x2a0] sm:$0xff]
    %v207 = vld [vmem:[#allocation7 + $0x2a8] sm:$0xff]
    %v208 = vld [vmem:[#allocation7 + $0x2b0] sm:$0xff]
    %v209 = vld [vmem:[#allocation7 + $0x2b8] sm:$0xff]
    %v210 = vld [vmem:[#allocation7 + $0x2c0] sm:$0xff]
    %v211 = vld [vmem:[#allocation7 + $0x2c8] sm:$0xff]
    %v212 = vld [vmem:[#allocation7 + $0x2d0] sm:$0xff]
    %v213 = vld [vmem:[#allocation7 + $0x2d8] sm:$0xff]
    %v214 = vld [vmem:[#allocation7 + $0x2e0] sm:$0xff]
    %v215 = vld [vmem:[#allocation7 + $0x2e8] sm:$0xff]
    %v216 = vld [vmem:[#allocation7 + $0x2f0] sm:$0xff]
    %v217 = vld [vmem:[#allocation7 + $0x2f8] sm:$0xff]
    %v218 = vld [vmem:[#allocation7 + $0x300] sm:$0xff]
    %v219 = vld [vmem:[#allocation7 + $0x308] sm:$0xff]
    %v220 = vld [vmem:[#allocation7 + $0x310] sm:$0xff]
    %v221 = vld [vmem:[#allocation7 + $0x318] sm:$0xff]
    %v222 = vld [vmem:[#allocation7 + $0x320] sm:$0xff]
    %v223 = vld [vmem:[#allocation7 + $0x328] sm:$0xff]
    %v224 = vld [vmem:[#allocation7 + $0x330] sm:$0xff]
    %v225 = vld [vmem:[#allocation7 + $0x338] sm:$0xff]
    %v226 = vld [vmem:[#allocation7 + $0x340] sm:$0xff]
    %v227 = vld [vmem:[#allocation7 + $0x348] sm:$0xff]
    %v228 = vld [vmem:[#allocation7 + $0x350] sm:$0xff]
    %v229 = vld [vmem:[#allocation7 + $0x358] sm:$0xff]
    %v230 = vld [vmem:[#allocation7 + $0x360] sm:$0xff]
    %v231 = vld [vmem:[#allocation7 + $0x368] sm:$0xff]
    %v232 = vld [vmem:[#allocation7 + $0x370] sm:$0xff]
    %v233 = vld [vmem:[#allocation7 + $0x378] sm:$0xff]
    %v234 = vld [vmem:[#allocation7 + $0x380] sm:$0xff]
    %v235 = vld [vmem:[#allocation7 + $0x388] sm:$0xff]
    %v236 = vld [vmem:[#allocation7 + $0x390] sm:$0xff]
    %v237 = vld [vmem:[#allocation7 + $0x398] sm:$0xff]
    %v238 = vld [vmem:[#allocation7 + $0x3a0] sm:$0xff]
    %v239 = vld [vmem:[#allocation7 + $0x3a8] sm:$0xff]
    %v240 = vld [vmem:[#allocation7 + $0x3b0] sm:$0xff]
    %v241 = vld [vmem:[#allocation7 + $0x3b8] sm:$0xff]
    %v242 = vld [vmem:[#allocation7 + $0x3c0] sm:$0xff]
    %v243 = vld [vmem:[#allocation7 + $0x3c8] sm:$0xff]
    %v244 = vld [vmem:[#allocation7 + $0x3d0] sm:$0xff]
    %v245 = vld [vmem:[#allocation7 + $0x3d8] sm:$0xff]
    %v246 = vld [vmem:[#allocation7 + $0x3e0] sm:$0xff]
    %v247 = vld [vmem:[#allocation7 + $0x3e8] sm:$0xff]
    %v248 = vld [vmem:[#allocation7 + $0x3f0] sm:$0xff]
    %v249 = vld [vmem:[#allocation7 + $0x3f8] sm:$0xff]
    %v250 = vld [vmem:[#allocation7 + $0x400] sm:$0xff]
    %v251 = vld [vmem:[#allocation7 + $0x408] sm:$0xff]
    %v252 = vld [vmem:[#allocation7 + $0x410] sm:$0xff]
    %v253 = vld [vmem:[#allocation7 + $0x418] sm:$0xff]
    %v254 = vld [vmem:[#allocation7 + $0x420] sm:$0xff]
    %v255 = vld [vmem:[#allocation7 + $0x428] sm:$0xff]
    %v256 = vld [vmem:[#allocation7 + $0x430] sm:$0xff]
    %v257 = vld [vmem:[#allocation7 + $0x438] sm:$0xff]
    %v258 = vld [vmem:[#allocation7 + $0x440] sm:$0xff]
    %v259 = vld [vmem:[#allocation7 + $0x448] sm:$0xff]
    %v260 = vld [vmem:[#allocation7 + $0x450] sm:$0xff]
    %v261 = vld [vmem:[#allocation7 + $0x458] sm:$0xff]
    %v262 = vld [vmem:[#allocation7 + $0x460] sm:$0xff]
    %v263 = vld [vmem:[#allocation7 + $0x468] sm:$0xff]
    %v264 = vld [vmem:[#allocation7 + $0x470] sm:$0xff]
    %v265 = vld [vmem:[#allocation7 + $0x478] sm:$0xff]
    %v266 = vld [vmem:[#allocation7 + $0x480] sm:$0xff]
    %v267 = vld [vmem:[#allocation7 + $0x488] sm:$0xff]
    %v268 = vld [vmem:[#allocation7 + $0x490] sm:$0xff]
    %v269 = vld [vmem:[#allocation7 + $0x498] sm:$0xff]
    %v270 = vld [vmem:[#allocation7 + $0x4a0] sm:$0xff]
    %v271 = vld [vmem:[#allocation7 + $0x4a8] sm:$0xff]
    %v272 = vld [vmem:[#allocation7 + $0x4b0] sm:$0xff]
    %v273 = vld [vmem:[#allocation7 + $0x4b8] sm:$0xff]
    %v274 = vld [vmem:[#allocation7 + $0x4c0] sm:$0xff]
    %v275 = vld [vmem:[#allocation7 + $0x4c8] sm:$0xff]
    %v276 = vld [vmem:[#allocation7 + $0x4d0] sm:$0xff]
    %v277 = vld [vmem:[#allocation7 + $0x4d8] sm:$0xff]
    %v278 = vld [vmem:[#allocation7 + $0x4e0] sm:$0xff]
    %v279 = vld [vmem:[#allocation7 + $0x4e8] sm:$0xff]
    %v280 = vld [vmem:[#allocation7 + $0x4f0] sm:$0xff]
    %v281 = vld [vmem:[#allocation7 + $0x4f8] sm:$0xff]
    %v282 = vld [vmem:[#allocation7 + $0x500] sm:$0xff]
    %v283 = vld [vmem:[#allocation7 + $0x508] sm:$0xff]
    %v284 = vld [vmem:[#allocation7 + $0x510] sm:$0xff]
    %v285 = vld [vmem:[#allocation7 + $0x518] sm:$0xff]
    %v286 = vld [vmem:[#allocation7 + $0x520] sm:$0xff]
    %v287 = vld [vmem:[#allocation7 + $0x528] sm:$0xff]
    %v288 = vld [vmem:[#allocation7 + $0x530] sm:$0xff]
    %v289 = vld [vmem:[#allocation7 + $0x538] sm:$0xff]
    %v290 = vld [vmem:[#allocation7 + $0x540] sm:$0xff]
    %v291 = vld [vmem:[#allocation7 + $0x548] sm:$0xff]
    %v292 = vld [vmem:[#allocation7 + $0x550] sm:$0xff]
    %v293 = vld [vmem:[#allocation7 + $0x558] sm:$0xff]
    %v294 = vld [vmem:[#allocation7 + $0x560] sm:$0xff]
    %v295 = vld [vmem:[#allocation7 + $0x568] sm:$0xff]
    %v296 = vld [vmem:[#allocation7 + $0x570] sm:$0xff]
    %v297 = vld [vmem:[#allocation7 + $0x578] sm:$0xff]
    %v298 = vld [vmem:[#allocation7 + $0x580] sm:$0xff]
    %v299 = vld [vmem:[#allocation7 + $0x588] sm:$0xff]
    %v300 = vld [vmem:[#allocation7 + $0x590] sm:$0xff]
    %v301 = vld [vmem:[#allocation7 + $0x598] sm:$0xff]
    %v302 = vld [vmem:[#allocation7 + $0x5a0] sm:$0xff]
    %v303 = vld [vmem:[#allocation7 + $0x5a8] sm:$0xff]
    %v304 = vld [vmem:[#allocation7 + $0x5b0] sm:$0xff]
    %v305 = vld [vmem:[#allocation7 + $0x5b8] sm:$0xff]
    %v306 = vld [vmem:[#allocation7 + $0x5c0] sm:$0xff]
    %v307 = vld [vmem:[#allocation7 + $0x5c8] sm:$0xff]
    %v308 = vld [vmem:[#allocation7 + $0x5d0] sm:$0xff]
    %v309 = vld [vmem:[#allocation7 + $0x5d8] sm:$0xff]
    %v310 = vld [vmem:[#allocation7 + $0x5e0] sm:$0xff]
    %v311 = vld [vmem:[#allocation7 + $0x5e8] sm:$0xff]
    %v312 = vld [vmem:[#allocation7 + $0x5f0] sm:$0xff]
    %v313 = vld [vmem:[#allocation7 + $0x5f8] sm:$0xff]
    %v314 = vld [vmem:[#allocation7 + $0x600] sm:$0xff]
    %v315 = vld [vmem:[#allocation7 + $0x608] sm:$0xff]
    %v316 = vld [vmem:[#allocation7 + $0x610] sm:$0xff]
    %v317 = vld [vmem:[#allocation7 + $0x618] sm:$0xff]
    %v318 = vld [vmem:[#allocation7 + $0x620] sm:$0xff]
    %v319 = vld [vmem:[#allocation7 + $0x628] sm:$0xff]
    %v320 = vld [vmem:[#allocation7 + $0x630] sm:$0xff]
    %v321 = vld [vmem:[#allocation7 + $0x638] sm:$0xff]
    %v322 = vld [vmem:[#allocation7 + $0x640] sm:$0xff]
    %v323 = vld [vmem:[#allocation7 + $0x648] sm:$0xff]
    %v324 = vld [vmem:[#allocation7 + $0x650] sm:$0xff]
    %v325 = vld [vmem:[#allocation7 + $0x658] sm:$0xff]
    %v326 = vld [vmem:[#allocation7 + $0x660] sm:$0xff]
    %v327 = vld [vmem:[#allocation7 + $0x668] sm:$0xff]
    %v328 = vld [vmem:[#allocation7 + $0x670] sm:$0xff]
    %v329 = vld [vmem:[#allocation7 + $0x678] sm:$0xff]
    %v330 = vld [vmem:[#allocation7 + $0x680] sm:$0xff]
    %v331 = vld [vmem:[#allocation7 + $0x688] sm:$0xff]
    %v332 = vld [vmem:[#allocation7 + $0x690] sm:$0xff]
    %v333 = vld [vmem:[#allocation7 + $0x698] sm:$0xff]
    %v334 = vld [vmem:[#allocation7 + $0x6a0] sm:$0xff]
    %v335 = vld [vmem:[#allocation7 + $0x6a8] sm:$0xff]
    %v336 = vld [vmem:[#allocation7 + $0x6b0] sm:$0xff]
    %v337 = vld [vmem:[#allocation7 + $0x6b8] sm:$0xff]
    %v338 = vld [vmem:[#allocation7 + $0x6c0] sm:$0xff]
    %v339 = vld [vmem:[#allocation7 + $0x6c8] sm:$0xff]
    %v340 = vld [vmem:[#allocation7 + $0x6d0] sm:$0xff]
    %v341 = vld [vmem:[#allocation7 + $0x6d8] sm:$0xff]
    %v342 = vld [vmem:[#allocation7 + $0x6e0] sm:$0xff]
    %v343 = vld [vmem:[#allocation7 + $0x6e8] sm:$0xff]
    %v344 = vld [vmem:[#allocation7 + $0x6f0] sm:$0xff]
    %v345 = vld [vmem:[#allocation7 + $0x6f8] sm:$0xff]
    %v346 = vld [vmem:[#allocation7 + $0x700] sm:$0xff]
    %v347 = vld [vmem:[#allocation7 + $0x708] sm:$0xff]
    %v348 = vld [vmem:[#allocation7 + $0x710] sm:$0xff]
    %v349 = vld [vmem:[#allocation7 + $0x718] sm:$0xff]
    %v350 = vld [vmem:[#allocation7 + $0x720] sm:$0xff]
    %v351 = vld [vmem:[#allocation7 + $0x728] sm:$0xff]
    %v352 = vld [vmem:[#allocation7 + $0x730] sm:$0xff]
    %v353 = vld [vmem:[#allocation7 + $0x738] sm:$0xff]
    %v354 = vld [vmem:[#allocation7 + $0x740] sm:$0xff]
    %v355 = vld [vmem:[#allocation7 + $0x748] sm:$0xff]
    %v356 = vld [vmem:[#allocation7 + $0x750] sm:$0xff]
    %v357 = vld [vmem:[#allocation7 + $0x758] sm:$0xff]
    %v358 = vld [vmem:[#allocation7 + $0x760] sm:$0xff]
    %v359 = vld [vmem:[#allocation7 + $0x768] sm:$0xff]
    %v360 = vld [vmem:[#allocation7 + $0x770] sm:$0xff]
    %v361 = vld [vmem:[#allocation7 + $0x778] sm:$0xff]
    %v362 = vld [vmem:[#allocation7 + $0x780] sm:$0xff]
    %v363 = vld [vmem:[#allocation7 + $0x788] sm:$0xff]
    %v364 = vld [vmem:[#allocation7 + $0x790] sm:$0xff]
    %v365 = vld [vmem:[#allocation7 + $0x798] sm:$0xff]
    %v366 = vld [vmem:[#allocation7 + $0x7a0] sm:$0xff]
    %v367 = vld [vmem:[#allocation7 + $0x7a8] sm:$0xff]
    %v368 = vld [vmem:[#allocation7 + $0x7b0] sm:$0xff]
    %v369 = vld [vmem:[#allocation7 + $0x7b8] sm:$0xff]
    %v370 = vld [vmem:[#allocation7 + $0x7c0] sm:$0xff]
    %v371 = vld [vmem:[#allocation7 + $0x7c8] sm:$0xff]
    %v372 = vld [vmem:[#allocation7 + $0x7d0] sm:$0xff]
    %v373 = vld [vmem:[#allocation7 + $0x7d8] sm:$0xff]
    %v374 = vld [vmem:[#allocation7 + $0x7e0] sm:$0xff]
    %v375 = vld [vmem:[#allocation7 + $0x7e8] sm:$0xff]
    %v376 = vld [vmem:[#allocation7 + $0x7f0] sm:$0xff]
    %v377 = vld [vmem:[#allocation7 + $0x7f8] sm:$0xff]
    %v378 = vld [vmem:[#allocation7 + $0x800] sm:$0xff]
    %v379 = vld [vmem:[#allocation7 + $0x808] sm:$0xff]
    %v380 = vld [vmem:[#allocation7 + $0x810] sm:$0xff]
    %v381 = vld [vmem:[#allocation7 + $0x818] sm:$0xff]
    %v382 = vld [vmem:[#allocation7 + $0x820] sm:$0xff]
    %v383 = vld [vmem:[#allocation7 + $0x828] sm:$0xff]
    %v384 = vld [vmem:[#allocation7 + $0x830] sm:$0xff]
    %v385 = vld [vmem:[#allocation7 + $0x838] sm:$0xff]
    %v386 = vld [vmem:[#allocation7 + $0x840] sm:$0xff]
    %v387 = vld [vmem:[#allocation7 + $0x848] sm:$0xff]
    %v388 = vld [vmem:[#allocation7 + $0x850] sm:$0xff]
    %v389 = vld [vmem:[#allocation7 + $0x858] sm:$0xff]
    %v390 = vld [vmem:[#allocation7 + $0x860] sm:$0xff]
    %v391 = vld [vmem:[#allocation7 + $0x868] sm:$0xff]
    %v392 = vld [vmem:[#allocation7 + $0x870] sm:$0xff]
    %v393 = vld [vmem:[#allocation7 + $0x878] sm:$0xff]
    %v394 = vld [vmem:[#allocation7 + $0x880] sm:$0xff]
    %v395 = vld [vmem:[#allocation7 + $0x888] sm:$0xff]
    %v396 = vld [vmem:[#allocation7 + $0x890] sm:$0xff]
    %v397 = vld [vmem:[#allocation7 + $0x898] sm:$0xff]
    %v398 = vld [vmem:[#allocation7 + $0x8a0] sm:$0xff]
    %v399 = vld [vmem:[#allocation7 + $0x8a8] sm:$0xff]
    %v400 = vld [vmem:[#allocation7 + $0x8b0] sm:$0xff]
    %v401 = vld [vmem:[#allocation7 + $0x8b8] sm:$0xff]
    %v402 = vld [vmem:[#allocation7 + $0x8c0] sm:$0xff]
    %v403 = vld [vmem:[#allocation7 + $0x8c8] sm:$0xff]
    %v404 = vld [vmem:[#allocation7 + $0x8d0] sm:$0xff]
    %v405 = vld [vmem:[#allocation7 + $0x8d8] sm:$0xff]
    %v406 = vld [vmem:[#allocation7 + $0x8e0] sm:$0xff]
    %v407 = vld [vmem:[#allocation7 + $0x8e8] sm:$0xff]
    %v408 = vld [vmem:[#allocation7 + $0x8f0] sm:$0xff]
    %v409 = vld [vmem:[#allocation7 + $0x8f8] sm:$0xff]
    %v554 = vunpack.c.l.b16 %v266
    %v555 = vunpack.c.h.b16 %v266
    %v556 = vunpack.c.l.b16 %v267
    %v557 = vunpack.c.h.b16 %v267
    %v558 = vunpack.c.l.b16 %v268
    %v559 = vunpack.c.h.b16 %v268
    %v560 = vunpack.c.l.b16 %v269
    %v561 = vunpack.c.h.b16 %v269
    %v562 = vunpack.c.l.b16 %v270
    %v563 = vunpack.c.h.b16 %v270
    %v564 = vunpack.c.l.b16 %v271
    %v565 = vunpack.c.h.b16 %v271
    %v566 = vunpack.c.l.b16 %v272
    %v567 = vunpack.c.h.b16 %v272
    %v568 = vunpack.c.l.b16 %v273
    %v569 = vunpack.c.h.b16 %v273
    %v570 = vunpack.c.l.b16 %v274
    %v571 = vunpack.c.h.b16 %v274
    %v572 = vunpack.c.l.b16 %v275
    %v573 = vunpack.c.h.b16 %v275
    %v574 = vunpack.c.l.b16 %v276
    %v575 = vunpack.c.h.b16 %v276
    %v576 = vunpack.c.l.b16 %v277
    %v577 = vunpack.c.h.b16 %v277
    %v578 = vunpack.c.l.b16 %v278
    %v579 = vunpack.c.h.b16 %v278
    %v580 = vunpack.c.l.b16 %v279
    %v581 = vunpack.c.h.b16 %v279
    %v582 = vunpack.c.l.b16 %v280
    %v583 = vunpack.c.h.b16 %v280
    %v584 = vunpack.c.l.b16 %v281
    %v585 = vunpack.c.h.b16 %v281
    %v586 = vunpack.c.l.b16 %v282
    %v587 = vunpack.c.h.b16 %v282
    %v588 = vunpack.c.l.b16 %v283
    %v589 = vunpack.c.h.b16 %v283
    %v590 = vunpack.c.l.b16 %v284
    %v591 = vunpack.c.h.b16 %v284
    %v592 = vunpack.c.l.b16 %v285
    %v593 = vunpack.c.h.b16 %v285
    %v594 = vunpack.c.l.b16 %v286
    %v595 = vunpack.c.h.b16 %v286
    %v596 = vunpack.c.l.b16 %v287
    %v597 = vunpack.c.h.b16 %v287
    %v598 = vunpack.c.l.b16 %v288
    %v599 = vunpack.c.h.b16 %v288
    %v600 = vunpack.c.l.b16 %v289
    %v601 = vunpack.c.h.b16 %v289
    %v602 = vunpack.c.l.b16 %v290
    %v603 = vunpack.c.h.b16 %v290
    %v604 = vunpack.c.l.b16 %v291
    %v605 = vunpack.c.h.b16 %v291
    %v606 = vunpack.c.l.b16 %v292
    %v607 = vunpack.c.h.b16 %v292
    %v608 = vunpack.c.l.b16 %v293
    %v609 = vunpack.c.h.b16 %v293
    %v610 = vunpack.c.l.b16 %v294
    %v611 = vunpack.c.h.b16 %v294
    %v612 = vunpack.c.l.b16 %v295
    %v613 = vunpack.c.h.b16 %v295
    %v614 = vunpack.c.l.b16 %v296
    %v615 = vunpack.c.h.b16 %v296
    %v616 = vunpack.c.l.b16 %v297
    %v617 = vunpack.c.h.b16 %v297
    %v618 = vunpack.c.l.b16 %v298
    %v619 = vunpack.c.h.b16 %v298
    %v620 = vunpack.c.l.b16 %v299
    %v621 = vunpack.c.h.b16 %v299
    %v622 = vunpack.c.l.b16 %v300
    %v623 = vunpack.c.h.b16 %v300
    %v624 = vunpack.c.l.b16 %v301
    %v625 = vunpack.c.h.b16 %v301
    %v626 = vunpack.c.l.b16 %v302
    %v627 = vunpack.c.h.b16 %v302
    %v628 = vunpack.c.l.b16 %v303
    %v629 = vunpack.c.h.b16 %v303
    %v630 = vunpack.c.l.b16 %v304
    %v631 = vunpack.c.h.b16 %v304
    %v632 = vunpack.c.l.b16 %v305
    %v633 = vunpack.c.h.b16 %v305
    %v634 = vunpack.c.l.b16 %v306
    %v635 = vunpack.c.h.b16 %v306
    %v636 = vunpack.c.l.b16 %v307
    %v637 = vunpack.c.h.b16 %v307
    %v638 = vunpack.c.l.b16 %v308
    %v639 = vunpack.c.h.b16 %v308
    %v640 = vunpack.c.l.b16 %v309
    %v641 = vunpack.c.h.b16 %v309
    %v642 = vunpack.c.l.b16 %v310
    %v643 = vunpack.c.h.b16 %v310
    %v644 = vunpack.c.l.b16 %v311
    %v645 = vunpack.c.h.b16 %v311
    %v646 = vunpack.c.l.b16 %v312
    %v647 = vunpack.c.h.b16 %v312
    %v648 = vunpack.c.l.b16 %v313
    %v649 = vunpack.c.h.b16 %v313
    %v650 = vunpack.c.l.b16 %v314
    %v651 = vunpack.c.h.b16 %v314
    %v652 = vunpack.c.l.b16 %v315
    %v653 = vunpack.c.h.b16 %v315
    %v654 = vunpack.c.l.b16 %v316
    %v655 = vunpack.c.h.b16 %v316
    %v656 = vunpack.c.l.b16 %v317
    %v657 = vunpack.c.h.b16 %v317
    %v658 = vunpack.c.l.b16 %v318
    %v659 = vunpack.c.h.b16 %v318
    %v660 = vunpack.c.l.b16 %v319
    %v661 = vunpack.c.h.b16 %v319
    %v662 = vunpack.c.l.b16 %v320
    %v663 = vunpack.c.h.b16 %v320
    %v664 = vunpack.c.l.b16 %v321
    %v665 = vunpack.c.h.b16 %v321
    %v666 = vunpack.c.l.b16 %v322
    %v667 = vunpack.c.h.b16 %v322
    %v668 = vunpack.c.l.b16 %v323
    %v669 = vunpack.c.h.b16 %v323
    %v670 = vunpack.c.l.b16 %v324
    %v671 = vunpack.c.h.b16 %v324
    %v672 = vunpack.c.l.b16 %v325
    %v673 = vunpack.c.h.b16 %v325
    %v674 = vunpack.c.l.b16 %v326
    %v675 = vunpack.c.h.b16 %v326
    %v676 = vunpack.c.l.b16 %v327
    %v677 = vunpack.c.h.b16 %v327
    %v678 = vunpack.c.l.b16 %v328
    %v679 = vunpack.c.h.b16 %v328
    %v680 = vunpack.c.l.b16 %v329
    %v681 = vunpack.c.h.b16 %v329
    %v682 = vunpack.c.l.b16 %v330
    %v683 = vunpack.c.h.b16 %v330
    %v684 = vunpack.c.l.b16 %v331
    %v685 = vunpack.c.h.b16 %v331
    %v686 = vunpack.c.l.b16 %v332
    %v687 = vunpack.c.h.b16 %v332
    %v688 = vunpack.c.l.b16 %v333
    %v689 = vunpack.c.h.b16 %v333
    %v690 = vunpack.c.l.b16 %v334
    %v691 = vunpack.c.h.b16 %v334
    %v692 = vunpack.c.l.b16 %v335
    %v693 = vunpack.c.h.b16 %v335
    %v694 = vunpack.c.l.b16 %v336
    %v695 = vunpack.c.h.b16 %v336
    %v696 = vunpack.c.l.b16 %v337
    %v697 = vunpack.c.h.b16 %v337
    %v698 = vunpack.c.l.b16 %v338
    %v699 = vunpack.c.h.b16 %v338
    %v700 = vunpack.c.l.b16 %v339
    %v701 = vunpack.c.h.b16 %v339
    %v702 = vunpack.c.l.b16 %v340
    %v703 = vunpack.c.h.b16 %v340
    %v704 = vunpack.c.l.b16 %v341
    %v705 = vunpack.c.h.b16 %v341
    %v706 = vunpack.c.l.b16 %v342
    %v707 = vunpack.c.h.b16 %v342
    %v708 = vunpack.c.l.b16 %v343
    %v709 = vunpack.c.h.b16 %v343
    %v710 = vunpack.c.l.b16 %v344
    %v711 = vunpack.c.h.b16 %v344
    %v712 = vunpack.c.l.b16 %v345
    %v713 = vunpack.c.h.b16 %v345
    %v714 = vunpack.c.l.b16 %v346
    %v715 = vunpack.c.h.b16 %v346
    %v716 = vunpack.c.l.b16 %v347
    %v717 = vunpack.c.h.b16 %v347
    %v718 = vunpack.c.l.b16 %v348
    %v719 = vunpack.c.h.b16 %v348
    %v720 = vunpack.c.l.b16 %v349
    %v721 = vunpack.c.h.b16 %v349
    %v722 = vunpack.c.l.b16 %v350
    %v723 = vunpack.c.h.b16 %v350
    %v724 = vunpack.c.l.b16 %v351
    %v725 = vunpack.c.h.b16 %v351
    %v726 = vunpack.c.l.b16 %v352
    %v727 = vunpack.c.h.b16 %v352
    %v728 = vunpack.c.l.b16 %v353
    %v729 = vunpack.c.h.b16 %v353
    %v730 = vunpack.c.l.b16 %v354
    %v731 = vunpack.c.h.b16 %v354
    %v732 = vunpack.c.l.b16 %v355
    %v733 = vunpack.c.h.b16 %v355
    %v734 = vunpack.c.l.b16 %v356
    %v735 = vunpack.c.h.b16 %v356
    %v736 = vunpack.c.l.b16 %v357
    %v737 = vunpack.c.h.b16 %v357
    %v738 = vunpack.c.l.b16 %v358
    %v739 = vunpack.c.h.b16 %v358
    %v740 = vunpack.c.l.b16 %v359
    %v741 = vunpack.c.h.b16 %v359
    %v742 = vunpack.c.l.b16 %v360
    %v743 = vunpack.c.h.b16 %v360
    %v744 = vunpack.c.l.b16 %v361
    %v745 = vunpack.c.h.b16 %v361
    %v746 = vunpack.c.l.b16 %v362
    %v747 = vunpack.c.h.b16 %v362
    %v748 = vunpack.c.l.b16 %v363
    %v749 = vunpack.c.h.b16 %v363
    %v750 = vunpack.c.l.b16 %v364
    %v751 = vunpack.c.h.b16 %v364
    %v752 = vunpack.c.l.b16 %v365
    %v753 = vunpack.c.h.b16 %v365
    %v754 = vunpack.c.l.b16 %v366
    %v755 = vunpack.c.h.b16 %v366
    %v756 = vunpack.c.l.b16 %v367
    %v757 = vunpack.c.h.b16 %v367
    %v758 = vunpack.c.l.b16 %v368
    %v759 = vunpack.c.h.b16 %v368
    %v760 = vunpack.c.l.b16 %v369
    %v761 = vunpack.c.h.b16 %v369
    %v762 = vunpack.c.l.b16 %v370
    %v763 = vunpack.c.h.b16 %v370
    %v764 = vunpack.c.l.b16 %v371
    %v765 = vunpack.c.h.b16 %v371
    %v766 = vunpack.c.l.b16 %v372
    %v767 = vunpack.c.h.b16 %v372
    %v768 = vunpack.c.l.b16 %v373
    %v769 = vunpack.c.h.b16 %v373
    %v770 = vunpack.c.l.b16 %v374
    %v771 = vunpack.c.h.b16 %v374
    %v772 = vunpack.c.l.b16 %v375
    %v773 = vunpack.c.h.b16 %v375
    %v774 = vunpack.c.l.b16 %v376
    %v775 = vunpack.c.h.b16 %v376
    %v776 = vunpack.c.l.b16 %v377
    %v777 = vunpack.c.h.b16 %v377
    %v778 = vunpack.c.l.b16 %v378
    %v779 = vunpack.c.h.b16 %v378
    %v780 = vunpack.c.l.b16 %v379
    %v781 = vunpack.c.h.b16 %v379
    %v782 = vunpack.c.l.b16 %v380
    %v783 = vunpack.c.h.b16 %v380
    %v784 = vunpack.c.l.b16 %v381
    %v785 = vunpack.c.h.b16 %v381
    %v786 = vunpack.c.l.b16 %v382
    %v787 = vunpack.c.h.b16 %v382
    %v788 = vunpack.c.l.b16 %v383
    %v789 = vunpack.c.h.b16 %v383
    %v790 = vunpack.c.l.b16 %v384
    %v791 = vunpack.c.h.b16 %v384
    %v792 = vunpack.c.l.b16 %v385
    %v793 = vunpack.c.h.b16 %v385
    %v794 = vunpack.c.l.b16 %v386
    %v795 = vunpack.c.h.b16 %v386
    %v796 = vunpack.c.l.b16 %v387
    %v797 = vunpack.c.h.b16 %v387
    %v798 = vunpack.c.l.b16 %v388
    %v799 = vunpack.c.h.b16 %v388
    %v800 = vunpack.c.l.b16 %v389
    %v801 = vunpack.c.h.b16 %v389
    %v802 = vunpack.c.l.b16 %v390
    %v803 = vunpack.c.h.b16 %v390
    %v804 = vunpack.c.l.b16 %v391
    %v805 = vunpack.c.h.b16 %v391
    %v806 = vunpack.c.l.b16 %v392
    %v807 = vunpack.c.h.b16 %v392
    %v808 = vunpack.c.l.b16 %v393
    %v809 = vunpack.c.h.b16 %v393
    %v810 = vunpack.c.l.b16 %v394
    %v811 = vunpack.c.h.b16 %v394
    %v812 = vunpack.c.l.b16 %v395
    %v813 = vunpack.c.h.b16 %v395
    %v814 = vunpack.c.l.b16 %v396
    %v815 = vunpack.c.h.b16 %v396
    %v816 = vunpack.c.l.b16 %v397
    %v817 = vunpack.c.h.b16 %v397
    %v818 = vunpack.c.l.b16 %v398
    %v819 = vunpack.c.h.b16 %v398
    %v820 = vunpack.c.l.b16 %v399
    %v821 = vunpack.c.h.b16 %v399
    %v822 = vunpack.c.l.b16 %v400
    %v823 = vunpack.c.h.b16 %v400
    %v824 = vunpack.c.l.b16 %v401
    %v825 = vunpack.c.h.b16 %v401
    %v826 = vunpack.c.l.b16 %v402
    %v827 = vunpack.c.h.b16 %v402
    %v828 = vunpack.c.l.b16 %v403
    %v829 = vunpack.c.h.b16 %v403
    %v830 = vunpack.c.l.b16 %v404
    %v831 = vunpack.c.h.b16 %v404
    %v832 = vunpack.c.l.b16 %v405
    %v833 = vunpack.c.h.b16 %v405
    %v834 = vunpack.c.l.b16 %v406
    %v835 = vunpack.c.h.b16 %v406
    %v836 = vunpack.c.l.b16 %v407
    %v837 = vunpack.c.h.b16 %v407
    %v838 = vunpack.c.l.b16 %v408
    %v839 = vunpack.c.h.b16 %v408
    %v840 = vunpack.c.l.b16 %v409
    %v841 = vunpack.c.h.b16 %v409
    %v842 = vpack.c.b16 %v560, %v554
    %v843 = vpack.c.b16 %v561, %v555
    %v844 = vpack.c.b16 %v562, %v556
    %v845 = vpack.c.b16 %v563, %v557
    %v846 = vpack.c.b16 %v564, %v558
    %v847 = vpack.c.b16 %v565, %v559
    %v848 = vpack.c.b16 %v572, %v566
    %v849 = vpack.c.b16 %v573, %v567
    %v850 = vpack.c.b16 %v574, %v568
    %v851 = vpack.c.b16 %v575, %v569
    %v852 = vpack.c.b16 %v576, %v570
    %v853 = vpack.c.b16 %v577, %v571
    %v854 = vpack.c.b16 %v584, %v578
    %v855 = vpack.c.b16 %v585, %v579
    %v856 = vpack.c.b16 %v586, %v580
    %v857 = vpack.c.b16 %v587, %v581
    %v858 = vpack.c.b16 %v588, %v582
    %v859 = vpack.c.b16 %v589, %v583
    %v860 = vpack.c.b16 %v596, %v590
    %v861 = vpack.c.b16 %v597, %v591
    %v862 = vpack.c.b16 %v598, %v592
    %v863 = vpack.c.b16 %v599, %v593
    %v864 = vpack.c.b16 %v600, %v594
    %v865 = vpack.c.b16 %v601, %v595
    %v866 = vpack.c.b16 %v608, %v602
    %v867 = vpack.c.b16 %v609, %v603
    %v868 = vpack.c.b16 %v610, %v604
    %v869 = vpack.c.b16 %v611, %v605
    %v870 = vpack.c.b16 %v612, %v606
    %v871 = vpack.c.b16 %v613, %v607
    %v872 = vpack.c.b16 %v620, %v614
    %v873 = vpack.c.b16 %v621, %v615
    %v874 = vpack.c.b16 %v622, %v616
    %v875 = vpack.c.b16 %v623, %v617
    %v876 = vpack.c.b16 %v624, %v618
    %v877 = vpack.c.b16 %v625, %v619
    %v878 = vpack.c.b16 %v632, %v626
    %v879 = vpack.c.b16 %v633, %v627
    %v880 = vpack.c.b16 %v634, %v628
    %v881 = vpack.c.b16 %v635, %v629
    %v882 = vpack.c.b16 %v636, %v630
    %v883 = vpack.c.b16 %v637, %v631
    %v884 = vpack.c.b16 %v644, %v638
    %v885 = vpack.c.b16 %v645, %v639
    %v886 = vpack.c.b16 %v646, %v640
    %v887 = vpack.c.b16 %v647, %v641
    %v888 = vpack.c.b16 %v648, %v642
    %v889 = vpack.c.b16 %v649, %v643
    %v890 = vpack.c.b16 %v656, %v650
    %v891 = vpack.c.b16 %v657, %v651
    %v892 = vpack.c.b16 %v658, %v652
    %v893 = vpack.c.b16 %v659, %v653
    %v894 = vpack.c.b16 %v660, %v654
    %v895 = vpack.c.b16 %v661, %v655
    %v896 = vpack.c.b16 %v668, %v662
    %v897 = vpack.c.b16 %v669, %v663
    %v898 = vpack.c.b16 %v670, %v664
    %v899 = vpack.c.b16 %v671, %v665
    %v900 = vpack.c.b16 %v672, %v666
    %v901 = vpack.c.b16 %v673, %v667
    %v902 = vpack.c.b16 %v680, %v674
    %v903 = vpack.c.b16 %v681, %v675
    %v904 = vpack.c.b16 %v682, %v676
    %v905 = vpack.c.b16 %v683, %v677
    %v906 = vpack.c.b16 %v684, %v678
    %v907 = vpack.c.b16 %v685, %v679
    %v908 = vpack.c.b16 %v692, %v686
    %v909 = vpack.c.b16 %v693, %v687
    %v910 = vpack.c.b16 %v694, %v688
    %v911 = vpack.c.b16 %v695, %v689
    %v912 = vpack.c.b16 %v696, %v690
    %v913 = vpack.c.b16 %v697, %v691
    %v914 = vpack.c.b16 %v704, %v698
    %v915 = vpack.c.b16 %v705, %v699
    %v916 = vpack.c.b16 %v706, %v700
    %v917 = vpack.c.b16 %v707, %v701
    %v918 = vpack.c.b16 %v708, %v702
    %v919 = vpack.c.b16 %v709, %v703
    %v920 = vpack.c.b16 %v716, %v710
    %v921 = vpack.c.b16 %v717, %v711
    %v922 = vpack.c.b16 %v718, %v712
    %v923 = vpack.c.b16 %v719, %v713
    %v924 = vpack.c.b16 %v720, %v714
    %v925 = vpack.c.b16 %v721, %v715
    %v926 = vpack.c.b16 %v728, %v722
    %v927 = vpack.c.b16 %v729, %v723
    %v928 = vpack.c.b16 %v730, %v724
    %v929 = vpack.c.b16 %v731, %v725
    %v930 = vpack.c.b16 %v732, %v726
    %v931 = vpack.c.b16 %v733, %v727
    %v932 = vpack.c.b16 %v740, %v734
    %v933 = vpack.c.b16 %v741, %v735
    %v934 = vpack.c.b16 %v742, %v736
    %v935 = vpack.c.b16 %v743, %v737
    %v936 = vpack.c.b16 %v744, %v738
    %v937 = vpack.c.b16 %v745, %v739
    %v938 = vpack.c.b16 %v752, %v746
    %v939 = vpack.c.b16 %v753, %v747
    %v940 = vpack.c.b16 %v754, %v748
    %v941 = vpack.c.b16 %v755, %v749
    %v942 = vpack.c.b16 %v756, %v750
    %v943 = vpack.c.b16 %v757, %v751
    %v944 = vpack.c.b16 %v764, %v758
    %v945 = vpack.c.b16 %v765, %v759
    %v946 = vpack.c.b16 %v766, %v760
    %v947 = vpack.c.b16 %v767, %v761
    %v948 = vpack.c.b16 %v768, %v762
    %v949 = vpack.c.b16 %v769, %v763
    %v950 = vpack.c.b16 %v776, %v770
    %v951 = vpack.c.b16 %v777, %v771
    %v952 = vpack.c.b16 %v778, %v772
    %v953 = vpack.c.b16 %v779, %v773
    %v954 = vpack.c.b16 %v780, %v774
    %v955 = vpack.c.b16 %v781, %v775
    %v956 = vpack.c.b16 %v788, %v782
    %v957 = vpack.c.b16 %v789, %v783
    %v958 = vpack.c.b16 %v790, %v784
    %v959 = vpack.c.b16 %v791, %v785
    %v960 = vpack.c.b16 %v792, %v786
    %v961 = vpack.c.b16 %v793, %v787
    %v962 = vpack.c.b16 %v800, %v794
    %v963 = vpack.c.b16 %v801, %v795
    %v964 = vpack.c.b16 %v802, %v796
    %v965 = vpack.c.b16 %v803, %v797
    %v966 = vpack.c.b16 %v804, %v798
    %v967 = vpack.c.b16 %v805, %v799
    %v968 = vpack.c.b16 %v812, %v806
    %v969 = vpack.c.b16 %v813, %v807
    %v970 = vpack.c.b16 %v814, %v808
    %v971 = vpack.c.b16 %v815, %v809
    %v972 = vpack.c.b16 %v816, %v810
    %v973 = vpack.c.b16 %v817, %v811
    %v974 = vpack.c.b16 %v824, %v818
    %v975 = vpack.c.b16 %v825, %v819
    %v976 = vpack.c.b16 %v826, %v820
    %v977 = vpack.c.b16 %v827, %v821
    %v978 = vpack.c.b16 %v828, %v822
    %v979 = vpack.c.b16 %v829, %v823
    %v980 = vpack.c.b16 %v836, %v830
    %v981 = vpack.c.b16 %v837, %v831
    %v982 = vpack.c.b16 %v838, %v832
    %v983 = vpack.c.b16 %v839, %v833
    %v984 = vpack.c.b16 %v840, %v834
    %v985 = vpack.c.b16 %v841, %v835
    %1130 = vmatpush.bf16.msra.mxu0 %v884
    %1131 = vmatpush.bf16.msra.mxu0 %v878
    %1132 = vmatpush.bf16.msra.mxu0 %v872
    %1133 = vmatpush.bf16.msra.mxu0 %v866
    %1134 = vmatpush.bf16.msra.mxu0 %v860
    %1135 = vmatpush.bf16.msra.mxu0 %v854
    %1136 = vmatpush.bf16.msra.mxu0 %v848
    %1137 = vmatpush.bf16.msra.mxu0 %v842
    %1138 = vmatmul.bf16.gmra.mxu0 %v119
    %v1139 = vpop.f32.mrf.mxu0
    %v1140 = vadd.f32 0.0, %v1139
    %v1141 = vpop.f32.mrf.mxu0
    %1142 = vdwg.mxu0
    %1143 = vmatpush.bf16.msra.mxu0 %v932
    %1144 = vmatpush.bf16.msra.mxu0 %v926
    %1145 = vmatpush.bf16.msra.mxu0 %v920
    %1146 = vmatpush.bf16.msra.mxu0 %v914
    %1147 = vmatpush.bf16.msra.mxu0 %v908
    %1148 = vmatpush.bf16.msra.mxu0 %v902
    %1149 = vmatpush.bf16.msra.mxu0 %v896
    %1150 = vmatpush.bf16.msra.mxu0 %v890
    %1151 = vmatmul.bf16.gmra.mxu0 %v120
    %v1152 = vpop.f32.mrf.mxu0
    %v1153 = vadd.f32 %v1140, %v1152
    %v1154 = vpop.f32.mrf.mxu0
    %1155 = vdwg.mxu0
    %1156 = vmatpush.bf16.msra.mxu0 %v980
    %1157 = vmatpush.bf16.msra.mxu0 %v974
    %1158 = vmatpush.bf16.msra.mxu0 %v968
    %1159 = vmatpush.bf16.msra.mxu0 %v962
    %1160 = vmatpush.bf16.msra.mxu0 %v956
    %1161 = vmatpush.bf16.msra.mxu0 %v950
    %1162 = vmatpush.bf16.msra.mxu0 %v944
    %1163 = vmatpush.bf16.msra.mxu0 %v938
    %1164 = vmatmul.bf16.gmra.mxu0 %v121
    %v1165 = vpop.f32.mrf.mxu0
    %v1166 = vadd.f32 %v1153, %v1165
    %v1167 = vpop.f32.mrf.mxu0
    %1168 = vdwg.mxu0
    %1169 = vmatpush.bf16.msra.mxu0 %v885
    %1170 = vmatpush.bf16.msra.mxu0 %v879
    %1171 = vmatpush.bf16.msra.mxu0 %v873
    %1172 = vmatpush.bf16.msra.mxu0 %v867
    %1173 = vmatpush.bf16.msra.mxu0 %v861
    %1174 = vmatpush.bf16.msra.mxu0 %v855
    %1175 = vmatpush.bf16.msra.mxu0 %v849
    %1176 = vmatpush.bf16.msra.mxu0 %v843
    %1177 = vmatmul.bf16.gmra.mxu0 %v119
    %v1178 = vpop.f32.mrf.mxu0
    %v1179 = vadd.f32 0.0, %v1178
    %v1180 = vpop.f32.mrf.mxu0
    %1181 = vdwg.mxu0
    %1182 = vmatpush.bf16.msra.mxu0 %v933
    %1183 = vmatpush.bf16.msra.mxu0 %v927
    %1184 = vmatpush.bf16.msra.mxu0 %v921
    %1185 = vmatpush.bf16.msra.mxu0 %v915
    %1186 = vmatpush.bf16.msra.mxu0 %v909
    %1187 = vmatpush.bf16.msra.mxu0 %v903
    %1188 = vmatpush.bf16.msra.mxu0 %v897
    %1189 = vmatpush.bf16.msra.mxu0 %v891
    %1190 = vmatmul.bf16.gmra.mxu0 %v120
    %v1191 = vpop.f32.mrf.mxu0
    %v1192 = vadd.f32 %v1179, %v1191
    %v1193 = vpop.f32.mrf.mxu0
    %1194 = vdwg.mxu0
    %1195 = vmatpush.bf16.msra.mxu0 %v981
    %1196 = vmatpush.bf16.msra.mxu0 %v975
    %1197 = vmatpush.bf16.msra.mxu0 %v969
    %1198 = vmatpush.bf16.msra.mxu0 %v963
    %1199 = vmatpush.bf16.msra.mxu0 %v957
    %1200 = vmatpush.bf16.msra.mxu0 %v951
    %1201 = vmatpush.bf16.msra.mxu0 %v945
    %1202 = vmatpush.bf16.msra.mxu0 %v939
    %1203 = vmatmul.bf16.gmra.mxu0 %v121
    %v1204 = vpop.f32.mrf.mxu0
    %v1205 = vadd.f32 %v1192, %v1204
    %v1206 = vpop.f32.mrf.mxu0
    %1207 = vdwg.mxu0
    %1208 = vmatpush.bf16.msra.mxu0 %v886
    %1209 = vmatpush.bf16.msra.mxu0 %v880
    %1210 = vmatpush.bf16.msra.mxu0 %v874
    %1211 = vmatpush.bf16.msra.mxu0 %v868
    %1212 = vmatpush.bf16.msra.mxu0 %v862
    %1213 = vmatpush.bf16.msra.mxu0 %v856
    %1214 = vmatpush.bf16.msra.mxu0 %v850
    %1215 = vmatpush.bf16.msra.mxu0 %v844
    %1216 = vmatmul.bf16.gmra.mxu0 %v119
    %v1217 = vpop.f32.mrf.mxu0
    %v1218 = vadd.f32 0.0, %v1217
    %v1219 = vpop.f32.mrf.mxu0
    %1220 = vdwg.mxu0
    %1221 = vmatpush.bf16.msra.mxu0 %v934
    %1222 = vmatpush.bf16.msra.mxu0 %v928
    %1223 = vmatpush.bf16.msra.mxu0 %v922
    %1224 = vmatpush.bf16.msra.mxu0 %v916
    %1225 = vmatpush.bf16.msra.mxu0 %v910
    %1226 = vmatpush.bf16.msra.mxu0 %v904
    %1227 = vmatpush.bf16.msra.mxu0 %v898
    %1228 = vmatpush.bf16.msra.mxu0 %v892
    %1229 = vmatmul.bf16.gmra.mxu0 %v120
    %v1230 = vpop.f32.mrf.mxu0
    %v1231 = vadd.f32 %v1218, %v1230
    %v1232 = vpop.f32.mrf.mxu0
    %1233 = vdwg.mxu0
    %1234 = vmatpush.bf16.msra.mxu0 %v982
    %1235 = vmatpush.bf16.msra.mxu0 %v976
    %1236 = vmatpush.bf16.msra.mxu0 %v970
    %1237 = vmatpush.bf16.msra.mxu0 %v964
    %1238 = vmatpush.bf16.msra.mxu0 %v958
    %1239 = vmatpush.bf16.msra.mxu0 %v952
    %1240 = vmatpush.bf16.msra.mxu0 %v946
    %1241 = vmatpush.bf16.msra.mxu0 %v940
    %1242 = vmatmul.bf16.gmra.mxu0 %v121
    %v1243 = vpop.f32.mrf.mxu0
    %v1244 = vadd.f32 %v1231, %v1243
    %v1245 = vpop.f32.mrf.mxu0
    %1246 = vdwg.mxu0
    %1247 = vmatpush.bf16.msra.mxu0 %v887
    %1248 = vmatpush.bf16.msra.mxu0 %v881
    %1249 = vmatpush.bf16.msra.mxu0 %v875
    %1250 = vmatpush.bf16.msra.mxu0 %v869
    %1251 = vmatpush.bf16.msra.mxu0 %v863
    %1252 = vmatpush.bf16.msra.mxu0 %v857
    %1253 = vmatpush.bf16.msra.mxu0 %v851
    %1254 = vmatpush.bf16.msra.mxu0 %v845
    %1255 = vmatmul.bf16.gmra.mxu0 %v119
    %v1256 = vpop.f32.mrf.mxu0
    %v1257 = vadd.f32 0.0, %v1256
    %v1258 = vpop.f32.mrf.mxu0
    %1259 = vdwg.mxu0
    %1260 = vmatpush.bf16.msra.mxu0 %v935
    %1261 = vmatpush.bf16.msra.mxu0 %v929
    %1262 = vmatpush.bf16.msra.mxu0 %v923
    %1263 = vmatpush.bf16.msra.mxu0 %v917
    %1264 = vmatpush.bf16.msra.mxu0 %v911
    %1265 = vmatpush.bf16.msra.mxu0 %v905
    %1266 = vmatpush.bf16.msra.mxu0 %v899
    %1267 = vmatpush.bf16.msra.mxu0 %v893
    %1268 = vmatmul.bf16.gmra.mxu0 %v120
    %v1269 = vpop.f32.mrf.mxu0
    %v1270 = vadd.f32 %v1257, %v1269
    %v1271 = vpop.f32.mrf.mxu0
    %1272 = vdwg.mxu0
    %1273 = vmatpush.bf16.msra.mxu0 %v983
    %1274 = vmatpush.bf16.msra.mxu0 %v977
    %1275 = vmatpush.bf16.msra.mxu0 %v971
    %1276 = vmatpush.bf16.msra.mxu0 %v965
    %1277 = vmatpush.bf16.msra.mxu0 %v959
    %1278 = vmatpush.bf16.msra.mxu0 %v953
    %1279 = vmatpush.bf16.msra.mxu0 %v947
    %1280 = vmatpush.bf16.msra.mxu0 %v941
    %1281 = vmatmul.bf16.gmra.mxu0 %v121
    %v1282 = vpop.f32.mrf.mxu0
    %v1283 = vadd.f32 %v1270, %v1282
    %v1284 = vpop.f32.mrf.mxu0
    %1285 = vdwg.mxu0
    %1286 = vmatpush.bf16.msra.mxu0 %v888
    %1287 = vmatpush.bf16.msra.mxu0 %v882
    %1288 = vmatpush.bf16.msra.mxu0 %v876
    %1289 = vmatpush.bf16.msra.mxu0 %v870
    %1290 = vmatpush.bf16.msra.mxu0 %v864
    %1291 = vmatpush.bf16.msra.mxu0 %v858
    %1292 = vmatpush.bf16.msra.mxu0 %v852
    %1293 = vmatpush.bf16.msra.mxu0 %v846
    %1294 = vmatmul.bf16.gmra.mxu0 %v119
    %v1295 = vpop.f32.mrf.mxu0
    %v1296 = vadd.f32 0.0, %v1295
    %v1297 = vpop.f32.mrf.mxu0
    %1298 = vdwg.mxu0
    %1299 = vmatpush.bf16.msra.mxu0 %v936
    %1300 = vmatpush.bf16.msra.mxu0 %v930
    %1301 = vmatpush.bf16.msra.mxu0 %v924
    %1302 = vmatpush.bf16.msra.mxu0 %v918
    %1303 = vmatpush.bf16.msra.mxu0 %v912
    %1304 = vmatpush.bf16.msra.mxu0 %v906
    %1305 = vmatpush.bf16.msra.mxu0 %v900
    %1306 = vmatpush.bf16.msra.mxu0 %v894
    %1307 = vmatmul.bf16.gmra.mxu0 %v120
    %v1308 = vpop.f32.mrf.mxu0
    %v1309 = vadd.f32 %v1296, %v1308
    %v1310 = vpop.f32.mrf.mxu0
    %1311 = vdwg.mxu0
    %1312 = vmatpush.bf16.msra.mxu0 %v984
    %1313 = vmatpush.bf16.msra.mxu0 %v978
    %1314 = vmatpush.bf16.msra.mxu0 %v972
    %1315 = vmatpush.bf16.msra.mxu0 %v966
    %1316 = vmatpush.bf16.msra.mxu0 %v960
    %1317 = vmatpush.bf16.msra.mxu0 %v954
    %1318 = vmatpush.bf16.msra.mxu0 %v948
    %1319 = vmatpush.bf16.msra.mxu0 %v942
    %1320 = vmatmul.bf16.gmra.mxu0 %v121
    %v1321 = vpop.f32.mrf.mxu0
    %v1322 = vadd.f32 %v1309, %v1321
    %v1323 = vpop.f32.mrf.mxu0
    %1324 = vdwg.mxu0
    %1325 = vmatpush.bf16.msra.mxu0 %v889
    %1326 = vmatpush.bf16.msra.mxu0 %v883
    %1327 = vmatpush.bf16.msra.mxu0 %v877
    %1328 = vmatpush.bf16.msra.mxu0 %v871
    %1329 = vmatpush.bf16.msra.mxu0 %v865
    %1330 = vmatpush.bf16.msra.mxu0 %v859
    %1331 = vmatpush.bf16.msra.mxu0 %v853
    %1332 = vmatpush.bf16.msra.mxu0 %v847
    %1333 = vmatmul.bf16.gmra.mxu0 %v119
    %v1334 = vpop.f32.mrf.mxu0
    %v1335 = vadd.f32 0.0, %v1334
    %v1336 = vpop.f32.mrf.mxu0
    %1337 = vdwg.mxu0
    %1338 = vmatpush.bf16.msra.mxu0 %v937
    %1339 = vmatpush.bf16.msra.mxu0 %v931
    %1340 = vmatpush.bf16.msra.mxu0 %v925
    %1341 = vmatpush.bf16.msra.mxu0 %v919
    %1342 = vmatpush.bf16.msra.mxu0 %v913
    %1343 = vmatpush.bf16.msra.mxu0 %v907
    %1344 = vmatpush.bf16.msra.mxu0 %v901
    %1345 = vmatpush.bf16.msra.mxu0 %v895
    %1346 = vmatmul.bf16.gmra.mxu0 %v120
    %v1347 = vpop.f32.mrf.mxu0
    %v1348 = vadd.f32 %v1335, %v1347
    %v1349 = vpop.f32.mrf.mxu0
    %1350 = vdwg.mxu0
    %1351 = vmatpush.bf16.msra.mxu0 %v985
    %1352 = vmatpush.bf16.msra.mxu0 %v979
    %1353 = vmatpush.bf16.msra.mxu0 %v973
    %1354 = vmatpush.bf16.msra.mxu0 %v967
    %1355 = vmatpush.bf16.msra.mxu0 %v961
    %1356 = vmatpush.bf16.msra.mxu0 %v955
    %1357 = vmatpush.bf16.msra.mxu0 %v949
    %1358 = vmatpush.bf16.msra.mxu0 %v943
    %1359 = vmatmul.bf16.gmra.mxu0 %v121
    %v1360 = vpop.f32.mrf.mxu0
    %v1361 = vadd.f32 %v1348, %v1360
    %v1362 = vpop.f32.mrf.mxu0
    %1363 = vdwg.mxu0
    %v1508 = vunpack.c.l.b16 %v122
    %v1509 = vunpack.c.h.b16 %v122
    %v1510 = vunpack.c.l.b16 %v123
    %v1511 = vunpack.c.h.b16 %v123
    %v1512 = vunpack.c.l.b16 %v124
    %v1513 = vunpack.c.h.b16 %v124
    %v1514 = vunpack.c.l.b16 %v125
    %v1515 = vunpack.c.h.b16 %v125
    %v1516 = vunpack.c.l.b16 %v126
    %v1517 = vunpack.c.h.b16 %v126
    %v1518 = vunpack.c.l.b16 %v127
    %v1519 = vunpack.c.h.b16 %v127
    %v1520 = vunpack.c.l.b16 %v128
    %v1521 = vunpack.c.h.b16 %v128
    %v1522 = vunpack.c.l.b16 %v129
    %v1523 = vunpack.c.h.b16 %v129
    %v1524 = vunpack.c.l.b16 %v130
    %v1525 = vunpack.c.h.b16 %v130
    %v1526 = vunpack.c.l.b16 %v131
    %v1527 = vunpack.c.h.b16 %v131
    %v1528 = vunpack.c.l.b16 %v132
    %v1529 = vunpack.c.h.b16 %v132
    %v1530 = vunpack.c.l.b16 %v133
    %v1531 = vunpack.c.h.b16 %v133
    %v1532 = vunpack.c.l.b16 %v134
    %v1533 = vunpack.c.h.b16 %v134
    %v1534 = vunpack.c.l.b16 %v135
    %v1535 = vunpack.c.h.b16 %v135
    %v1536 = vunpack.c.l.b16 %v136
    %v1537 = vunpack.c.h.b16 %v136
    %v1538 = vunpack.c.l.b16 %v137
    %v1539 = vunpack.c.h.b16 %v137
    %v1540 = vunpack.c.l.b16 %v138
    %v1541 = vunpack.c.h.b16 %v138
    %v1542 = vunpack.c.l.b16 %v139
    %v1543 = vunpack.c.h.b16 %v139
    %v1544 = vunpack.c.l.b16 %v140
    %v1545 = vunpack.c.h.b16 %v140
    %v1546 = vunpack.c.l.b16 %v141
    %v1547 = vunpack.c.h.b16 %v141
    %v1548 = vunpack.c.l.b16 %v142
    %v1549 = vunpack.c.h.b16 %v142
    %v1550 = vunpack.c.l.b16 %v143
    %v1551 = vunpack.c.h.b16 %v143
    %v1552 = vunpack.c.l.b16 %v144
    %v1553 = vunpack.c.h.b16 %v144
    %v1554 = vunpack.c.l.b16 %v145
    %v1555 = vunpack.c.h.b16 %v145
    %v1556 = vunpack.c.l.b16 %v146
    %v1557 = vunpack.c.h.b16 %v146
    %v1558 = vunpack.c.l.b16 %v147
    %v1559 = vunpack.c.h.b16 %v147
    %v1560 = vunpack.c.l.b16 %v148
    %v1561 = vunpack.c.h.b16 %v148
    %v1562 = vunpack.c.l.b16 %v149
    %v1563 = vunpack.c.h.b16 %v149
    %v1564 = vunpack.c.l.b16 %v150
    %v1565 = vunpack.c.h.b16 %v150
    %v1566 = vunpack.c.l.b16 %v151
    %v1567 = vunpack.c.h.b16 %v151
    %v1568 = vunpack.c.l.b16 %v152
    %v1569 = vunpack.c.h.b16 %v152
    %v1570 = vunpack.c.l.b16 %v153
    %v1571 = vunpack.c.h.b16 %v153
    %v1572 = vunpack.c.l.b16 %v154
    %v1573 = vunpack.c.h.b16 %v154
    %v1574 = vunpack.c.l.b16 %v155
    %v1575 = vunpack.c.h.b16 %v155
    %v1576 = vunpack.c.l.b16 %v156
    %v1577 = vunpack.c.h.b16 %v156
    %v1578 = vunpack.c.l.b16 %v157
    %v1579 = vunpack.c.h.b16 %v157
    %v1580 = vunpack.c.l.b16 %v158
    %v1581 = vunpack.c.h.b16 %v158
    %v1582 = vunpack.c.l.b16 %v159
    %v1583 = vunpack.c.h.b16 %v159
    %v1584 = vunpack.c.l.b16 %v160
    %v1585 = vunpack.c.h.b16 %v160
    %v1586 = vunpack.c.l.b16 %v161
    %v1587 = vunpack.c.h.b16 %v161
    %v1588 = vunpack.c.l.b16 %v162
    %v1589 = vunpack.c.h.b16 %v162
    %v1590 = vunpack.c.l.b16 %v163
    %v1591 = vunpack.c.h.b16 %v163
    %v1592 = vunpack.c.l.b16 %v164
    %v1593 = vunpack.c.h.b16 %v164
    %v1594 = vunpack.c.l.b16 %v165
    %v1595 = vunpack.c.h.b16 %v165
    %v1596 = vunpack.c.l.b16 %v166
    %v1597 = vunpack.c.h.b16 %v166
    %v1598 = vunpack.c.l.b16 %v167
    %v1599 = vunpack.c.h.b16 %v167
    %v1600 = vunpack.c.l.b16 %v168
    %v1601 = vunpack.c.h.b16 %v168
    %v1602 = vunpack.c.l.b16 %v169
    %v1603 = vunpack.c.h.b16 %v169
    %v1604 = vunpack.c.l.b16 %v170
    %v1605 = vunpack.c.h.b16 %v170
    %v1606 = vunpack.c.l.b16 %v171
    %v1607 = vunpack.c.h.b16 %v171
    %v1608 = vunpack.c.l.b16 %v172
    %v1609 = vunpack.c.h.b16 %v172
    %v1610 = vunpack.c.l.b16 %v173
    %v1611 = vunpack.c.h.b16 %v173
    %v1612 = vunpack.c.l.b16 %v174
    %v1613 = vunpack.c.h.b16 %v174
    %v1614 = vunpack.c.l.b16 %v175
    %v1615 = vunpack.c.h.b16 %v175
    %v1616 = vunpack.c.l.b16 %v176
    %v1617 = vunpack.c.h.b16 %v176
    %v1618 = vunpack.c.l.b16 %v177
    %v1619 = vunpack.c.h.b16 %v177
    %v1620 = vunpack.c.l.b16 %v178
    %v1621 = vunpack.c.h.b16 %v178
    %v1622 = vunpack.c.l.b16 %v179
    %v1623 = vunpack.c.h.b16 %v179
    %v1624 = vunpack.c.l.b16 %v180
    %v1625 = vunpack.c.h.b16 %v180
    %v1626 = vunpack.c.l.b16 %v181
    %v1627 = vunpack.c.h.b16 %v181
    %v1628 = vunpack.c.l.b16 %v182
    %v1629 = vunpack.c.h.b16 %v182
    %v1630 = vunpack.c.l.b16 %v183
    %v1631 = vunpack.c.h.b16 %v183
    %v1632 = vunpack.c.l.b16 %v184
    %v1633 = vunpack.c.h.b16 %v184
    %v1634 = vunpack.c.l.b16 %v185
    %v1635 = vunpack.c.h.b16 %v185
    %v1636 = vunpack.c.l.b16 %v186
    %v1637 = vunpack.c.h.b16 %v186
    %v1638 = vunpack.c.l.b16 %v187
    %v1639 = vunpack.c.h.b16 %v187
    %v1640 = vunpack.c.l.b16 %v188
    %v1641 = vunpack.c.h.b16 %v188
    %v1642 = vunpack.c.l.b16 %v189
    %v1643 = vunpack.c.h.b16 %v189
    %v1644 = vunpack.c.l.b16 %v190
    %v1645 = vunpack.c.h.b16 %v190
    %v1646 = vunpack.c.l.b16 %v191
    %v1647 = vunpack.c.h.b16 %v191
    %v1648 = vunpack.c.l.b16 %v192
    %v1649 = vunpack.c.h.b16 %v192
    %v1650 = vunpack.c.l.b16 %v193
    %v1651 = vunpack.c.h.b16 %v193
    %v1652 = vunpack.c.l.b16 %v194
    %v1653 = vunpack.c.h.b16 %v194
    %v1654 = vunpack.c.l.b16 %v195
    %v1655 = vunpack.c.h.b16 %v195
    %v1656 = vunpack.c.l.b16 %v196
    %v1657 = vunpack.c.h.b16 %v196
    %v1658 = vunpack.c.l.b16 %v197
    %v1659 = vunpack.c.h.b16 %v197
    %v1660 = vunpack.c.l.b16 %v198
    %v1661 = vunpack.c.h.b16 %v198
    %v1662 = vunpack.c.l.b16 %v199
    %v1663 = vunpack.c.h.b16 %v199
    %v1664 = vunpack.c.l.b16 %v200
    %v1665 = vunpack.c.h.b16 %v200
    %v1666 = vunpack.c.l.b16 %v201
    %v1667 = vunpack.c.h.b16 %v201
    %v1668 = vunpack.c.l.b16 %v202
    %v1669 = vunpack.c.h.b16 %v202
    %v1670 = vunpack.c.l.b16 %v203
    %v1671 = vunpack.c.h.b16 %v203
    %v1672 = vunpack.c.l.b16 %v204
    %v1673 = vunpack.c.h.b16 %v204
    %v1674 = vunpack.c.l.b16 %v205
    %v1675 = vunpack.c.h.b16 %v205
    %v1676 = vunpack.c.l.b16 %v206
    %v1677 = vunpack.c.h.b16 %v206
    %v1678 = vunpack.c.l.b16 %v207
    %v1679 = vunpack.c.h.b16 %v207
    %v1680 = vunpack.c.l.b16 %v208
    %v1681 = vunpack.c.h.b16 %v208
    %v1682 = vunpack.c.l.b16 %v209
    %v1683 = vunpack.c.h.b16 %v209
    %v1684 = vunpack.c.l.b16 %v210
    %v1685 = vunpack.c.h.b16 %v210
    %v1686 = vunpack.c.l.b16 %v211
    %v1687 = vunpack.c.h.b16 %v211
    %v1688 = vunpack.c.l.b16 %v212
    %v1689 = vunpack.c.h.b16 %v212
    %v1690 = vunpack.c.l.b16 %v213
    %v1691 = vunpack.c.h.b16 %v213
    %v1692 = vunpack.c.l.b16 %v214
    %v1693 = vunpack.c.h.b16 %v214
    %v1694 = vunpack.c.l.b16 %v215
    %v1695 = vunpack.c.h.b16 %v215
    %v1696 = vunpack.c.l.b16 %v216
    %v1697 = vunpack.c.h.b16 %v216
    %v1698 = vunpack.c.l.b16 %v217
    %v1699 = vunpack.c.h.b16 %v217
    %v1700 = vunpack.c.l.b16 %v218
    %v1701 = vunpack.c.h.b16 %v218
    %v1702 = vunpack.c.l.b16 %v219
    %v1703 = vunpack.c.h.b16 %v219
    %v1704 = vunpack.c.l.b16 %v220
    %v1705 = vunpack.c.h.b16 %v220
    %v1706 = vunpack.c.l.b16 %v221
    %v1707 = vunpack.c.h.b16 %v221
    %v1708 = vunpack.c.l.b16 %v222
    %v1709 = vunpack.c.h.b16 %v222
    %v1710 = vunpack.c.l.b16 %v223
    %v1711 = vunpack.c.h.b16 %v223
    %v1712 = vunpack.c.l.b16 %v224
    %v1713 = vunpack.c.h.b16 %v224
    %v1714 = vunpack.c.l.b16 %v225
    %v1715 = vunpack.c.h.b16 %v225
    %v1716 = vunpack.c.l.b16 %v226
    %v1717 = vunpack.c.h.b16 %v226
    %v1718 = vunpack.c.l.b16 %v227
    %v1719 = vunpack.c.h.b16 %v227
    %v1720 = vunpack.c.l.b16 %v228
    %v1721 = vunpack.c.h.b16 %v228
    %v1722 = vunpack.c.l.b16 %v229
    %v1723 = vunpack.c.h.b16 %v229
    %v1724 = vunpack.c.l.b16 %v230
    %v1725 = vunpack.c.h.b16 %v230
    %v1726 = vunpack.c.l.b16 %v231
    %v1727 = vunpack.c.h.b16 %v231
    %v1728 = vunpack.c.l.b16 %v232
    %v1729 = vunpack.c.h.b16 %v232
    %v1730 = vunpack.c.l.b16 %v233
    %v1731 = vunpack.c.h.b16 %v233
    %v1732 = vunpack.c.l.b16 %v234
    %v1733 = vunpack.c.h.b16 %v234
    %v1734 = vunpack.c.l.b16 %v235
    %v1735 = vunpack.c.h.b16 %v235
    %v1736 = vunpack.c.l.b16 %v236
    %v1737 = vunpack.c.h.b16 %v236
    %v1738 = vunpack.c.l.b16 %v237
    %v1739 = vunpack.c.h.b16 %v237
    %v1740 = vunpack.c.l.b16 %v238
    %v1741 = vunpack.c.h.b16 %v238
    %v1742 = vunpack.c.l.b16 %v239
    %v1743 = vunpack.c.h.b16 %v239
    %v1744 = vunpack.c.l.b16 %v240
    %v1745 = vunpack.c.h.b16 %v240
    %v1746 = vunpack.c.l.b16 %v241
    %v1747 = vunpack.c.h.b16 %v241
    %v1748 = vunpack.c.l.b16 %v242
    %v1749 = vunpack.c.h.b16 %v242
    %v1750 = vunpack.c.l.b16 %v243
    %v1751 = vunpack.c.h.b16 %v243
    %v1752 = vunpack.c.l.b16 %v244
    %v1753 = vunpack.c.h.b16 %v244
    %v1754 = vunpack.c.l.b16 %v245
    %v1755 = vunpack.c.h.b16 %v245
    %v1756 = vunpack.c.l.b16 %v246
    %v1757 = vunpack.c.h.b16 %v246
    %v1758 = vunpack.c.l.b16 %v247
    %v1759 = vunpack.c.h.b16 %v247
    %v1760 = vunpack.c.l.b16 %v248
    %v1761 = vunpack.c.h.b16 %v248
    %v1762 = vunpack.c.l.b16 %v249
    %v1763 = vunpack.c.h.b16 %v249
    %v1764 = vunpack.c.l.b16 %v250
    %v1765 = vunpack.c.h.b16 %v250
    %v1766 = vunpack.c.l.b16 %v251
    %v1767 = vunpack.c.h.b16 %v251
    %v1768 = vunpack.c.l.b16 %v252
    %v1769 = vunpack.c.h.b16 %v252
    %v1770 = vunpack.c.l.b16 %v253
    %v1771 = vunpack.c.h.b16 %v253
    %v1772 = vunpack.c.l.b16 %v254
    %v1773 = vunpack.c.h.b16 %v254
    %v1774 = vunpack.c.l.b16 %v255
    %v1775 = vunpack.c.h.b16 %v255
    %v1776 = vunpack.c.l.b16 %v256
    %v1777 = vunpack.c.h.b16 %v256
    %v1778 = vunpack.c.l.b16 %v257
    %v1779 = vunpack.c.h.b16 %v257
    %v1780 = vunpack.c.l.b16 %v258
    %v1781 = vunpack.c.h.b16 %v258
    %v1782 = vunpack.c.l.b16 %v259
    %v1783 = vunpack.c.h.b16 %v259
    %v1784 = vunpack.c.l.b16 %v260
    %v1785 = vunpack.c.h.b16 %v260
    %v1786 = vunpack.c.l.b16 %v261
    %v1787 = vunpack.c.h.b16 %v261
    %v1788 = vunpack.c.l.b16 %v262
    %v1789 = vunpack.c.h.b16 %v262
    %v1790 = vunpack.c.l.b16 %v263
    %v1791 = vunpack.c.h.b16 %v263
    %v1792 = vunpack.c.l.b16 %v264
    %v1793 = vunpack.c.h.b16 %v264
    %v1794 = vunpack.c.l.b16 %v265
    %v1795 = vunpack.c.h.b16 %v265
    %v1796 = vpack.c.b16 %v1514, %v1508
    %v1797 = vpack.c.b16 %v1515, %v1509
    %v1798 = vpack.c.b16 %v1516, %v1510
    %v1799 = vpack.c.b16 %v1517, %v1511
    %v1800 = vpack.c.b16 %v1518, %v1512
    %v1801 = vpack.c.b16 %v1519, %v1513
    %v1802 = vpack.c.b16 %v1526, %v1520
    %v1803 = vpack.c.b16 %v1527, %v1521
    %v1804 = vpack.c.b16 %v1528, %v1522
    %v1805 = vpack.c.b16 %v1529, %v1523
    %v1806 = vpack.c.b16 %v1530, %v1524
    %v1807 = vpack.c.b16 %v1531, %v1525
    %v1808 = vpack.c.b16 %v1538, %v1532
    %v1809 = vpack.c.b16 %v1539, %v1533
    %v1810 = vpack.c.b16 %v1540, %v1534
    %v1811 = vpack.c.b16 %v1541, %v1535
    %v1812 = vpack.c.b16 %v1542, %v1536
    %v1813 = vpack.c.b16 %v1543, %v1537
    %v1814 = vpack.c.b16 %v1550, %v1544
    %v1815 = vpack.c.b16 %v1551, %v1545
    %v1816 = vpack.c.b16 %v1552, %v1546
    %v1817 = vpack.c.b16 %v1553, %v1547
    %v1818 = vpack.c.b16 %v1554, %v1548
    %v1819 = vpack.c.b16 %v1555, %v1549
    %v1820 = vpack.c.b16 %v1562, %v1556
    %v1821 = vpack.c.b16 %v1563, %v1557
    %v1822 = vpack.c.b16 %v1564, %v1558
    %v1823 = vpack.c.b16 %v1565, %v1559
    %v1824 = vpack.c.b16 %v1566, %v1560
    %v1825 = vpack.c.b16 %v1567, %v1561
    %v1826 = vpack.c.b16 %v1574, %v1568
    %v1827 = vpack.c.b16 %v1575, %v1569
    %v1828 = vpack.c.b16 %v1576, %v1570
    %v1829 = vpack.c.b16 %v1577, %v1571
    %v1830 = vpack.c.b16 %v1578, %v1572
    %v1831 = vpack.c.b16 %v1579, %v1573
    %v1832 = vpack.c.b16 %v1586, %v1580
    %v1833 = vpack.c.b16 %v1587, %v1581
    %v1834 = vpack.c.b16 %v1588, %v1582
    %v1835 = vpack.c.b16 %v1589, %v1583
    %v1836 = vpack.c.b16 %v1590, %v1584
    %v1837 = vpack.c.b16 %v1591, %v1585
    %v1838 = vpack.c.b16 %v1598, %v1592
    %v1839 = vpack.c.b16 %v1599, %v1593
    %v1840 = vpack.c.b16 %v1600, %v1594
    %v1841 = vpack.c.b16 %v1601, %v1595
    %v1842 = vpack.c.b16 %v1602, %v1596
    %v1843 = vpack.c.b16 %v1603, %v1597
    %v1844 = vpack.c.b16 %v1610, %v1604
    %v1845 = vpack.c.b16 %v1611, %v1605
    %v1846 = vpack.c.b16 %v1612, %v1606
    %v1847 = vpack.c.b16 %v1613, %v1607
    %v1848 = vpack.c.b16 %v1614, %v1608
    %v1849 = vpack.c.b16 %v1615, %v1609
    %v1850 = vpack.c.b16 %v1622, %v1616
    %v1851 = vpack.c.b16 %v1623, %v1617
    %v1852 = vpack.c.b16 %v1624, %v1618
    %v1853 = vpack.c.b16 %v1625, %v1619
    %v1854 = vpack.c.b16 %v1626, %v1620
    %v1855 = vpack.c.b16 %v1627, %v1621
    %v1856 = vpack.c.b16 %v1634, %v1628
    %v1857 = vpack.c.b16 %v1635, %v1629
    %v1858 = vpack.c.b16 %v1636, %v1630
    %v1859 = vpack.c.b16 %v1637, %v1631
    %v1860 = vpack.c.b16 %v1638, %v1632
    %v1861 = vpack.c.b16 %v1639, %v1633
    %v1862 = vpack.c.b16 %v1646, %v1640
    %v1863 = vpack.c.b16 %v1647, %v1641
    %v1864 = vpack.c.b16 %v1648, %v1642
    %v1865 = vpack.c.b16 %v1649, %v1643
    %v1866 = vpack.c.b16 %v1650, %v1644
    %v1867 = vpack.c.b16 %v1651, %v1645
    %v1868 = vpack.c.b16 %v1658, %v1652
    %v1869 = vpack.c.b16 %v1659, %v1653
    %v1870 = vpack.c.b16 %v1660, %v1654
    %v1871 = vpack.c.b16 %v1661, %v1655
    %v1872 = vpack.c.b16 %v1662, %v1656
    %v1873 = vpack.c.b16 %v1663, %v1657
    %v1874 = vpack.c.b16 %v1670, %v1664
    %v1875 = vpack.c.b16 %v1671, %v1665
    %v1876 = vpack.c.b16 %v1672, %v1666
    %v1877 = vpack.c.b16 %v1673, %v1667
    %v1878 = vpack.c.b16 %v1674, %v1668
    %v1879 = vpack.c.b16 %v1675, %v1669
    %v1880 = vpack.c.b16 %v1682, %v1676
    %v1881 = vpack.c.b16 %v1683, %v1677
    %v1882 = vpack.c.b16 %v1684, %v1678
    %v1883 = vpack.c.b16 %v1685, %v1679
    %v1884 = vpack.c.b16 %v1686, %v1680
    %v1885 = vpack.c.b16 %v1687, %v1681
    %v1886 = vpack.c.b16 %v1694, %v1688
    %v1887 = vpack.c.b16 %v1695, %v1689
    %v1888 = vpack.c.b16 %v1696, %v1690
    %v1889 = vpack.c.b16 %v1697, %v1691
    %v1890 = vpack.c.b16 %v1698, %v1692
    %v1891 = vpack.c.b16 %v1699, %v1693
    %v1892 = vpack.c.b16 %v1706, %v1700
    %v1893 = vpack.c.b16 %v1707, %v1701
    %v1894 = vpack.c.b16 %v1708, %v1702
    %v1895 = vpack.c.b16 %v1709, %v1703
    %v1896 = vpack.c.b16 %v1710, %v1704
    %v1897 = vpack.c.b16 %v1711, %v1705
    %v1898 = vpack.c.b16 %v1718, %v1712
    %v1899 = vpack.c.b16 %v1719, %v1713
    %v1900 = vpack.c.b16 %v1720, %v1714
    %v1901 = vpack.c.b16 %v1721, %v1715
    %v1902 = vpack.c.b16 %v1722, %v1716
    %v1903 = vpack.c.b16 %v1723, %v1717
    %v1904 = vpack.c.b16 %v1730, %v1724
    %v1905 = vpack.c.b16 %v1731, %v1725
    %v1906 = vpack.c.b16 %v1732, %v1726
    %v1907 = vpack.c.b16 %v1733, %v1727
    %v1908 = vpack.c.b16 %v1734, %v1728
    %v1909 = vpack.c.b16 %v1735, %v1729
    %v1910 = vpack.c.b16 %v1742, %v1736
    %v1911 = vpack.c.b16 %v1743, %v1737
    %v1912 = vpack.c.b16 %v1744, %v1738
    %v1913 = vpack.c.b16 %v1745, %v1739
    %v1914 = vpack.c.b16 %v1746, %v1740
    %v1915 = vpack.c.b16 %v1747, %v1741
    %v1916 = vpack.c.b16 %v1754, %v1748
    %v1917 = vpack.c.b16 %v1755, %v1749
    %v1918 = vpack.c.b16 %v1756, %v1750
    %v1919 = vpack.c.b16 %v1757, %v1751
    %v1920 = vpack.c.b16 %v1758, %v1752
    %v1921 = vpack.c.b16 %v1759, %v1753
    %v1922 = vpack.c.b16 %v1766, %v1760
    %v1923 = vpack.c.b16 %v1767, %v1761
    %v1924 = vpack.c.b16 %v1768, %v1762
    %v1925 = vpack.c.b16 %v1769, %v1763
    %v1926 = vpack.c.b16 %v1770, %v1764
    %v1927 = vpack.c.b16 %v1771, %v1765
    %v1928 = vpack.c.b16 %v1778, %v1772
    %v1929 = vpack.c.b16 %v1779, %v1773
    %v1930 = vpack.c.b16 %v1780, %v1774
    %v1931 = vpack.c.b16 %v1781, %v1775
    %v1932 = vpack.c.b16 %v1782, %v1776
    %v1933 = vpack.c.b16 %v1783, %v1777
    %v1934 = vpack.c.b16 %v1790, %v1784
    %v1935 = vpack.c.b16 %v1791, %v1785
    %v1936 = vpack.c.b16 %v1792, %v1786
    %v1937 = vpack.c.b16 %v1793, %v1787
    %v1938 = vpack.c.b16 %v1794, %v1788
    %v1939 = vpack.c.b16 %v1795, %v1789
    %2084 = vmatpush.bf16.msra.mxu0 %v1838
    %2085 = vmatpush.bf16.msra.mxu0 %v1832
    %2086 = vmatpush.bf16.msra.mxu0 %v1826
    %2087 = vmatpush.bf16.msra.mxu0 %v1820
    %2088 = vmatpush.bf16.msra.mxu0 %v1814
    %2089 = vmatpush.bf16.msra.mxu0 %v1808
    %2090 = vmatpush.bf16.msra.mxu0 %v1802
    %2091 = vmatpush.bf16.msra.mxu0 %v1796
    %2092 = vmatmul.bf16.gmra.mxu0 %v113
    %v2093 = vpop.f32.mrf.mxu0
    %v2094 = vadd.f32 %v1166, %v2093
    %v2095 = vpop.f32.mrf.mxu0
    %2096 = vdwg.mxu0
    %2097 = vmatpush.bf16.msra.mxu0 %v1886
    %2098 = vmatpush.bf16.msra.mxu0 %v1880
    %2099 = vmatpush.bf16.msra.mxu0 %v1874
    %2100 = vmatpush.bf16.msra.mxu0 %v1868
    %2101 = vmatpush.bf16.msra.mxu0 %v1862
    %2102 = vmatpush.bf16.msra.mxu0 %v1856
    %2103 = vmatpush.bf16.msra.mxu0 %v1850
    %2104 = vmatpush.bf16.msra.mxu0 %v1844
    %2105 = vmatmul.bf16.gmra.mxu0 %v114
    %v2106 = vpop.f32.mrf.mxu0
    %v2107 = vadd.f32 %v2094, %v2106
    %v2108 = vpop.f32.mrf.mxu0
    %2109 = vdwg.mxu0
    %2110 = vmatpush.bf16.msra.mxu0 %v1934
    %2111 = vmatpush.bf16.msra.mxu0 %v1928
    %2112 = vmatpush.bf16.msra.mxu0 %v1922
    %2113 = vmatpush.bf16.msra.mxu0 %v1916
    %2114 = vmatpush.bf16.msra.mxu0 %v1910
    %2115 = vmatpush.bf16.msra.mxu0 %v1904
    %2116 = vmatpush.bf16.msra.mxu0 %v1898
    %2117 = vmatpush.bf16.msra.mxu0 %v1892
    %2118 = vmatmul.bf16.gmra.mxu0 %v115
    %v2119 = vpop.f32.mrf.mxu0
    %v2120 = vadd.f32 %v2107, %v2119
    %v2121 = vpop.f32.mrf.mxu0
    %2122 = vdwg.mxu0
    %2123 = vmatpush.bf16.msra.mxu0 %v1839
    %2124 = vmatpush.bf16.msra.mxu0 %v1833
    %2125 = vmatpush.bf16.msra.mxu0 %v1827
    %2126 = vmatpush.bf16.msra.mxu0 %v1821
    %2127 = vmatpush.bf16.msra.mxu0 %v1815
    %2128 = vmatpush.bf16.msra.mxu0 %v1809
    %2129 = vmatpush.bf16.msra.mxu0 %v1803
    %2130 = vmatpush.bf16.msra.mxu0 %v1797
    %2131 = vmatmul.bf16.gmra.mxu0 %v113
    %v2132 = vpop.f32.mrf.mxu0
    %v2133 = vadd.f32 %v1205, %v2132
    %v2134 = vpop.f32.mrf.mxu0
    %2135 = vdwg.mxu0
    %2136 = vmatpush.bf16.msra.mxu0 %v1887
    %2137 = vmatpush.bf16.msra.mxu0 %v1881
    %2138 = vmatpush.bf16.msra.mxu0 %v1875
    %2139 = vmatpush.bf16.msra.mxu0 %v1869
    %2140 = vmatpush.bf16.msra.mxu0 %v1863
    %2141 = vmatpush.bf16.msra.mxu0 %v1857
    %2142 = vmatpush.bf16.msra.mxu0 %v1851
    %2143 = vmatpush.bf16.msra.mxu0 %v1845
    %2144 = vmatmul.bf16.gmra.mxu0 %v114
    %v2145 = vpop.f32.mrf.mxu0
    %v2146 = vadd.f32 %v2133, %v2145
    %v2147 = vpop.f32.mrf.mxu0
    %2148 = vdwg.mxu0
    %2149 = vmatpush.bf16.msra.mxu0 %v1935
    %2150 = vmatpush.bf16.msra.mxu0 %v1929
    %2151 = vmatpush.bf16.msra.mxu0 %v1923
    %2152 = vmatpush.bf16.msra.mxu0 %v1917
    %2153 = vmatpush.bf16.msra.mxu0 %v1911
    %2154 = vmatpush.bf16.msra.mxu0 %v1905
    %2155 = vmatpush.bf16.msra.mxu0 %v1899
    %2156 = vmatpush.bf16.msra.mxu0 %v1893
    %2157 = vmatmul.bf16.gmra.mxu0 %v115
    %v2158 = vpop.f32.mrf.mxu0
    %v2159 = vadd.f32 %v2146, %v2158
    %v2160 = vpop.f32.mrf.mxu0
    %2161 = vdwg.mxu0
    %2162 = vmatpush.bf16.msra.mxu0 %v1840
    %2163 = vmatpush.bf16.msra.mxu0 %v1834
    %2164 = vmatpush.bf16.msra.mxu0 %v1828
    %2165 = vmatpush.bf16.msra.mxu0 %v1822
    %2166 = vmatpush.bf16.msra.mxu0 %v1816
    %2167 = vmatpush.bf16.msra.mxu0 %v1810
    %2168 = vmatpush.bf16.msra.mxu0 %v1804
    %2169 = vmatpush.bf16.msra.mxu0 %v1798
    %2170 = vmatmul.bf16.gmra.mxu0 %v113
    %v2171 = vpop.f32.mrf.mxu0
    %v2172 = vadd.f32 %v1244, %v2171
    %v2173 = vpop.f32.mrf.mxu0
    %2174 = vdwg.mxu0
    %2175 = vmatpush.bf16.msra.mxu0 %v1888
    %2176 = vmatpush.bf16.msra.mxu0 %v1882
    %2177 = vmatpush.bf16.msra.mxu0 %v1876
    %2178 = vmatpush.bf16.msra.mxu0 %v1870
    %2179 = vmatpush.bf16.msra.mxu0 %v1864
    %2180 = vmatpush.bf16.msra.mxu0 %v1858
    %2181 = vmatpush.bf16.msra.mxu0 %v1852
    %2182 = vmatpush.bf16.msra.mxu0 %v1846
    %2183 = vmatmul.bf16.gmra.mxu0 %v114
    %v2184 = vpop.f32.mrf.mxu0
    %v2185 = vadd.f32 %v2172, %v2184
    %v2186 = vpop.f32.mrf.mxu0
    %2187 = vdwg.mxu0
    %2188 = vmatpush.bf16.msra.mxu0 %v1936
    %2189 = vmatpush.bf16.msra.mxu0 %v1930
    %2190 = vmatpush.bf16.msra.mxu0 %v1924
    %2191 = vmatpush.bf16.msra.mxu0 %v1918
    %2192 = vmatpush.bf16.msra.mxu0 %v1912
    %2193 = vmatpush.bf16.msra.mxu0 %v1906
    %2194 = vmatpush.bf16.msra.mxu0 %v1900
    %2195 = vmatpush.bf16.msra.mxu0 %v1894
    %2196 = vmatmul.bf16.gmra.mxu0 %v115
    %v2197 = vpop.f32.mrf.mxu0
    %v2198 = vadd.f32 %v2185, %v2197
    %v2199 = vpop.f32.mrf.mxu0
    %2200 = vdwg.mxu0
    %2201 = vmatpush.bf16.msra.mxu0 %v1841
    %2202 = vmatpush.bf16.msra.mxu0 %v1835
    %2203 = vmatpush.bf16.msra.mxu0 %v1829
    %2204 = vmatpush.bf16.msra.mxu0 %v1823
    %2205 = vmatpush.bf16.msra.mxu0 %v1817
    %2206 = vmatpush.bf16.msra.mxu0 %v1811
    %2207 = vmatpush.bf16.msra.mxu0 %v1805
    %2208 = vmatpush.bf16.msra.mxu0 %v1799
    %2209 = vmatmul.bf16.gmra.mxu0 %v113
    %v2210 = vpop.f32.mrf.mxu0
    %v2211 = vadd.f32 %v1283, %v2210
    %v2212 = vpop.f32.mrf.mxu0
    %2213 = vdwg.mxu0
    %2214 = vmatpush.bf16.msra.mxu0 %v1889
    %2215 = vmatpush.bf16.msra.mxu0 %v1883
    %2216 = vmatpush.bf16.msra.mxu0 %v1877
    %2217 = vmatpush.bf16.msra.mxu0 %v1871
    %2218 = vmatpush.bf16.msra.mxu0 %v1865
    %2219 = vmatpush.bf16.msra.mxu0 %v1859
    %2220 = vmatpush.bf16.msra.mxu0 %v1853
    %2221 = vmatpush.bf16.msra.mxu0 %v1847
    %2222 = vmatmul.bf16.gmra.mxu0 %v114
    %v2223 = vpop.f32.mrf.mxu0
    %v2224 = vadd.f32 %v2211, %v2223
    %v2225 = vpop.f32.mrf.mxu0
    %2226 = vdwg.mxu0
    %2227 = vmatpush.bf16.msra.mxu0 %v1937
    %2228 = vmatpush.bf16.msra.mxu0 %v1931
    %2229 = vmatpush.bf16.msra.mxu0 %v1925
    %2230 = vmatpush.bf16.msra.mxu0 %v1919
    %2231 = vmatpush.bf16.msra.mxu0 %v1913
    %2232 = vmatpush.bf16.msra.mxu0 %v1907
    %2233 = vmatpush.bf16.msra.mxu0 %v1901
    %2234 = vmatpush.bf16.msra.mxu0 %v1895
    %2235 = vmatmul.bf16.gmra.mxu0 %v115
    %v2236 = vpop.f32.mrf.mxu0
    %v2237 = vadd.f32 %v2224, %v2236
    %v2238 = vpop.f32.mrf.mxu0
    %2239 = vdwg.mxu0
    %2240 = vmatpush.bf16.msra.mxu0 %v1842
    %2241 = vmatpush.bf16.msra.mxu0 %v1836
    %2242 = vmatpush.bf16.msra.mxu0 %v1830
    %2243 = vmatpush.bf16.msra.mxu0 %v1824
    %2244 = vmatpush.bf16.msra.mxu0 %v1818
    %2245 = vmatpush.bf16.msra.mxu0 %v1812
    %2246 = vmatpush.bf16.msra.mxu0 %v1806
    %2247 = vmatpush.bf16.msra.mxu0 %v1800
    %2248 = vmatmul.bf16.gmra.mxu0 %v113
    %v2249 = vpop.f32.mrf.mxu0
    %v2250 = vadd.f32 %v1322, %v2249
    %v2251 = vpop.f32.mrf.mxu0
    %2252 = vdwg.mxu0
    %2253 = vmatpush.bf16.msra.mxu0 %v1890
    %2254 = vmatpush.bf16.msra.mxu0 %v1884
    %2255 = vmatpush.bf16.msra.mxu0 %v1878
    %2256 = vmatpush.bf16.msra.mxu0 %v1872
    %2257 = vmatpush.bf16.msra.mxu0 %v1866
    %2258 = vmatpush.bf16.msra.mxu0 %v1860
    %2259 = vmatpush.bf16.msra.mxu0 %v1854
    %2260 = vmatpush.bf16.msra.mxu0 %v1848
    %2261 = vmatmul.bf16.gmra.mxu0 %v114
    %v2262 = vpop.f32.mrf.mxu0
    %v2263 = vadd.f32 %v2250, %v2262
    %v2264 = vpop.f32.mrf.mxu0
    %2265 = vdwg.mxu0
    %2266 = vmatpush.bf16.msra.mxu0 %v1938
    %2267 = vmatpush.bf16.msra.mxu0 %v1932
    %2268 = vmatpush.bf16.msra.mxu0 %v1926
    %2269 = vmatpush.bf16.msra.mxu0 %v1920
    %2270 = vmatpush.bf16.msra.mxu0 %v1914
    %2271 = vmatpush.bf16.msra.mxu0 %v1908
    %2272 = vmatpush.bf16.msra.mxu0 %v1902
    %2273 = vmatpush.bf16.msra.mxu0 %v1896
    %2274 = vmatmul.bf16.gmra.mxu0 %v115
    %v2275 = vpop.f32.mrf.mxu0
    %v2276 = vadd.f32 %v2263, %v2275
    %v2277 = vpop.f32.mrf.mxu0
    %2278 = vdwg.mxu0
    %2279 = vmatpush.bf16.msra.mxu0 %v1843
    %2280 = vmatpush.bf16.msra.mxu0 %v1837
    %2281 = vmatpush.bf16.msra.mxu0 %v1831
    %2282 = vmatpush.bf16.msra.mxu0 %v1825
    %2283 = vmatpush.bf16.msra.mxu0 %v1819
    %2284 = vmatpush.bf16.msra.mxu0 %v1813
    %2285 = vmatpush.bf16.msra.mxu0 %v1807
    %2286 = vmatpush.bf16.msra.mxu0 %v1801
    %2287 = vmatmul.bf16.gmra.mxu0 %v113
    %v2288 = vpop.f32.mrf.mxu0
    %v2289 = vadd.f32 %v1361, %v2288
    %v2290 = vpop.f32.mrf.mxu0
    %2291 = vdwg.mxu0
    %2292 = vmatpush.bf16.msra.mxu0 %v1891
    %2293 = vmatpush.bf16.msra.mxu0 %v1885
    %2294 = vmatpush.bf16.msra.mxu0 %v1879
    %2295 = vmatpush.bf16.msra.mxu0 %v1873
    %2296 = vmatpush.bf16.msra.mxu0 %v1867
    %2297 = vmatpush.bf16.msra.mxu0 %v1861
    %2298 = vmatpush.bf16.msra.mxu0 %v1855
    %2299 = vmatpush.bf16.msra.mxu0 %v1849
    %2300 = vmatmul.bf16.gmra.mxu0 %v114
    %v2301 = vpop.f32.mrf.mxu0
    %v2302 = vadd.f32 %v2289, %v2301
    %v2303 = vpop.f32.mrf.mxu0
    %2304 = vdwg.mxu0
    %2305 = vmatpush.bf16.msra.mxu0 %v1939
    %2306 = vmatpush.bf16.msra.mxu0 %v1933
    %2307 = vmatpush.bf16.msra.mxu0 %v1927
    %2308 = vmatpush.bf16.msra.mxu0 %v1921
    %2309 = vmatpush.bf16.msra.mxu0 %v1915
    %2310 = vmatpush.bf16.msra.mxu0 %v1909
    %2311 = vmatpush.bf16.msra.mxu0 %v1903
    %2312 = vmatpush.bf16.msra.mxu0 %v1897
    %2313 = vmatmul.bf16.gmra.mxu0 %v115
    %v2314 = vpop.f32.mrf.mxu0
    %v2315 = vadd.f32 %v2302, %v2314
    %v2316 = vpop.f32.mrf.mxu0
    %2317 = vdwg.mxu0
    %v2318 = vld [vmem:[#allocation8] sm:$0x3f]
    %v2320 = vperm.slane %v2318, 0
    %v2321 = vperm.slane %v2318, 1
    %v2322 = vperm.slane %v2318, 2
    %v2323 = vperm.slane %v2318, 3
    %v2324 = vperm.slane %v2318, 4
    %v2325 = vperm.slane %v2318, 5
    %v2332 = vadd.f32 %v2120, %v2320
    %v2333 = vadd.f32 %v2159, %v2321
    %v2334 = vadd.f32 %v2198, %v2322
    %v2335 = vadd.f32 %v2237, %v2323
    %v2336 = vadd.f32 %v2276, %v2324
    %v2337 = vadd.f32 %v2315, %v2325
    %v2338 = vpack.c.bf16 %v2332, %v2332
    %v2339 = vpack.c.bf16 %v2333, %v2333
    %v2340 = vpack.c.bf16 %v2334, %v2334
    %v2341 = vpack.c.bf16 %v2335, %v2335
    %v2342 = vpack.c.bf16 %v2336, %v2336
    %v2343 = vpack.c.bf16 %v2337, %v2337
    %v2344 = vld [vmem:[#allocation10] sm:$0xf]
    %v2345 = vld [vmem:[#allocation10 + $0x4] sm:$0xf]
    %v2346 = vld [vmem:[#allocation10 + $0x8] sm:$0xf]
    %v2347 = vld [vmem:[#allocation10 + $0xc] sm:$0xf]
    %v2348 = vld [vmem:[#allocation10 + $0x10] sm:$0xf]
    %v2349 = vld [vmem:[#allocation10 + $0x14] sm:$0xf]
    %v2350 = vld [vmem:[#allocation10 + $0x18] sm:$0xf]
    %v2351 = vld [vmem:[#allocation10 + $0x1c] sm:$0xf]
    %v2352 = vld [vmem:[#allocation10 + $0x20] sm:$0xf]
    %v2353 = vld [vmem:[#allocation10 + $0x24] sm:$0xf]
    %v2354 = vld [vmem:[#allocation10 + $0x28] sm:$0xf]
    %v2355 = vld [vmem:[#allocation10 + $0x2c] sm:$0xf]
    %v2356 = vld [vmem:[#allocation10 + $0x30] sm:$0xf]
    %v2357 = vld [vmem:[#allocation10 + $0x34] sm:$0xf]
    %v2358 = vld [vmem:[#allocation10 + $0x38] sm:$0xf]
    %v2359 = vld [vmem:[#allocation10 + $0x3c] sm:$0xf]
    %v2360 = vld [vmem:[#allocation10 + $0x40] sm:$0xf]
    %v2361 = vld [vmem:[#allocation10 + $0x44] sm:$0xf]
    %v2362 = vld [vmem:[#allocation10 + $0x48] sm:$0xf]
    %v2363 = vld [vmem:[#allocation10 + $0x4c] sm:$0xf]
    %v2364 = vld [vmem:[#allocation10 + $0x50] sm:$0xf]
    %v2365 = vld [vmem:[#allocation10 + $0x54] sm:$0xf]
    %v2366 = vld [vmem:[#allocation10 + $0x58] sm:$0xf]
    %v2367 = vld [vmem:[#allocation10 + $0x5c] sm:$0xf]
    %v2368 = vld [vmem:[#allocation10 + $0x60] sm:$0xf]
    %v2369 = vld [vmem:[#allocation10 + $0x64] sm:$0xf]
    %v2370 = vld [vmem:[#allocation10 + $0x68] sm:$0xf]
    %v2371 = vld [vmem:[#allocation10 + $0x6c] sm:$0xf]
    %v2372 = vld [vmem:[#allocation10 + $0x70] sm:$0xf]
    %v2373 = vld [vmem:[#allocation10 + $0x74] sm:$0xf]
    %v2374 = vld [vmem:[#allocation10 + $0x78] sm:$0xf]
    %v2375 = vld [vmem:[#allocation10 + $0x7c] sm:$0xf]
    %v2376 = vld [vmem:[#allocation10 + $0x80] sm:$0xf]
    %v2377 = vld [vmem:[#allocation10 + $0x84] sm:$0xf]
    %v2378 = vld [vmem:[#allocation10 + $0x88] sm:$0xf]
    %v2379 = vld [vmem:[#allocation10 + $0x8c] sm:$0xf]
    %v2380 = vld [vmem:[#allocation10 + $0x90] sm:$0xf]
    %v2381 = vld [vmem:[#allocation10 + $0x94] sm:$0xf]
    %v2382 = vld [vmem:[#allocation10 + $0x98] sm:$0xf]
    %v2383 = vld [vmem:[#allocation10 + $0x9c] sm:$0xf]
    %v2384 = vld [vmem:[#allocation10 + $0xa0] sm:$0xf]
    %v2385 = vld [vmem:[#allocation10 + $0xa4] sm:$0xf]
    %v2386 = vld [vmem:[#allocation10 + $0xa8] sm:$0xf]
    %v2387 = vld [vmem:[#allocation10 + $0xac] sm:$0xf]
    %v2388 = vld [vmem:[#allocation10 + $0xb0] sm:$0xf]
    %v2389 = vld [vmem:[#allocation10 + $0xb4] sm:$0xf]
    %v2390 = vld [vmem:[#allocation10 + $0xb8] sm:$0xf]
    %v2391 = vld [vmem:[#allocation10 + $0xbc] sm:$0xf]
    %v2392 = vld [vmem:[#allocation10 + $0xc0] sm:$0xf]
    %v2393 = vld [vmem:[#allocation10 + $0xc4] sm:$0xf]
    %v2394 = vld [vmem:[#allocation10 + $0xc8] sm:$0xf]
    %v2395 = vld [vmem:[#allocation10 + $0xcc] sm:$0xf]
    %v2396 = vld [vmem:[#allocation10 + $0xd0] sm:$0xf]
    %v2397 = vld [vmem:[#allocation10 + $0xd4] sm:$0xf]
    %v2398 = vld [vmem:[#allocation10 + $0xd8] sm:$0xf]
    %v2399 = vld [vmem:[#allocation10 + $0xdc] sm:$0xf]
    %v2400 = vld [vmem:[#allocation10 + $0xe0] sm:$0xf]
    %v2401 = vld [vmem:[#allocation10 + $0xe4] sm:$0xf]
    %v2402 = vld [vmem:[#allocation10 + $0xe8] sm:$0xf]
    %v2403 = vld [vmem:[#allocation10 + $0xec] sm:$0xf]
    %v2404 = vld [vmem:[#allocation10 + $0xf0] sm:$0xf]
    %v2405 = vld [vmem:[#allocation10 + $0xf4] sm:$0xf]
    %v2406 = vld [vmem:[#allocation10 + $0xf8] sm:$0xf]
    %v2407 = vld [vmem:[#allocation10 + $0xfc] sm:$0xf]
    %v2408 = vld [vmem:[#allocation10 + $0x100] sm:$0xf]
    %v2409 = vld [vmem:[#allocation10 + $0x104] sm:$0xf]
    %v2410 = vld [vmem:[#allocation10 + $0x108] sm:$0xf]
    %v2411 = vld [vmem:[#allocation10 + $0x10c] sm:$0xf]
    %v2412 = vld [vmem:[#allocation10 + $0x110] sm:$0xf]
    %v2413 = vld [vmem:[#allocation10 + $0x114] sm:$0xf]
    %v2414 = vld [vmem:[#allocation10 + $0x118] sm:$0xf]
    %v2415 = vld [vmem:[#allocation10 + $0x11c] sm:$0xf]
    %v2416 = vld [vmem:[#allocation10 + $0x120] sm:$0xf]
    %v2417 = vld [vmem:[#allocation10 + $0x124] sm:$0xf]
    %v2418 = vld [vmem:[#allocation10 + $0x128] sm:$0xf]
    %v2419 = vld [vmem:[#allocation10 + $0x12c] sm:$0xf]
    %v2420 = vld [vmem:[#allocation10 + $0x130] sm:$0xf]
    %v2421 = vld [vmem:[#allocation10 + $0x134] sm:$0xf]
    %v2422 = vld [vmem:[#allocation10 + $0x138] sm:$0xf]
    %v2423 = vld [vmem:[#allocation10 + $0x13c] sm:$0xf]
    %v2424 = vld [vmem:[#allocation10 + $0x140] sm:$0xf]
    %v2425 = vld [vmem:[#allocation10 + $0x144] sm:$0xf]
    %v2426 = vld [vmem:[#allocation10 + $0x148] sm:$0xf]
    %v2427 = vld [vmem:[#allocation10 + $0x14c] sm:$0xf]
    %v2428 = vld [vmem:[#allocation10 + $0x150] sm:$0xf]
    %v2429 = vld [vmem:[#allocation10 + $0x154] sm:$0xf]
    %v2430 = vld [vmem:[#allocation10 + $0x158] sm:$0xf]
    %v2431 = vld [vmem:[#allocation10 + $0x15c] sm:$0xf]
    %v2432 = vld [vmem:[#allocation10 + $0x160] sm:$0xf]
    %v2433 = vld [vmem:[#allocation10 + $0x164] sm:$0xf]
    %v2434 = vld [vmem:[#allocation10 + $0x168] sm:$0xf]
    %v2435 = vld [vmem:[#allocation10 + $0x16c] sm:$0xf]
    %v2436 = vld [vmem:[#allocation10 + $0x170] sm:$0xf]
    %v2437 = vld [vmem:[#allocation10 + $0x174] sm:$0xf]
    %v2438 = vld [vmem:[#allocation10 + $0x178] sm:$0xf]
    %v2439 = vld [vmem:[#allocation10 + $0x17c] sm:$0xf]
    %v2440 = vld [vmem:[#allocation11] sm:$0x1]
    %v2442 = vperm.slane %v2440, 0
    %v2540 = vunpack.c.l.b16 %v2344
    %v2541 = vunpack.c.l.b16 %v2345
    %v2542 = vunpack.c.l.b16 %v2346
    %v2543 = vunpack.c.l.b16 %v2347
    %v2544 = vunpack.c.l.b16 %v2348
    %v2545 = vunpack.c.l.b16 %v2349
    %v2546 = vunpack.c.l.b16 %v2350
    %v2547 = vunpack.c.l.b16 %v2351
    %v2548 = vunpack.c.l.b16 %v2352
    %v2549 = vunpack.c.l.b16 %v2353
    %v2550 = vunpack.c.l.b16 %v2354
    %v2551 = vunpack.c.l.b16 %v2355
    %v2552 = vunpack.c.l.b16 %v2356
    %v2553 = vunpack.c.l.b16 %v2357
    %v2554 = vunpack.c.l.b16 %v2358
    %v2555 = vunpack.c.l.b16 %v2359
    %v2556 = vunpack.c.l.b16 %v2360
    %v2557 = vunpack.c.l.b16 %v2361
    %v2558 = vunpack.c.l.b16 %v2362
    %v2559 = vunpack.c.l.b16 %v2363
    %v2560 = vunpack.c.l.b16 %v2364
    %v2561 = vunpack.c.l.b16 %v2365
    %v2562 = vunpack.c.l.b16 %v2366
    %v2563 = vunpack.c.l.b16 %v2367
    %v2564 = vunpack.c.l.b16 %v2368
    %v2565 = vunpack.c.l.b16 %v2369
    %v2566 = vunpack.c.l.b16 %v2370
    %v2567 = vunpack.c.l.b16 %v2371
    %v2568 = vunpack.c.l.b16 %v2372
    %v2569 = vunpack.c.l.b16 %v2373
    %v2570 = vunpack.c.l.b16 %v2374
    %v2571 = vunpack.c.l.b16 %v2375
    %v2572 = vunpack.c.l.b16 %v2376
    %v2573 = vunpack.c.l.b16 %v2377
    %v2574 = vunpack.c.l.b16 %v2378
    %v2575 = vunpack.c.l.b16 %v2379
    %v2576 = vunpack.c.l.b16 %v2380
    %v2577 = vunpack.c.l.b16 %v2381
    %v2578 = vunpack.c.l.b16 %v2382
    %v2579 = vunpack.c.l.b16 %v2383
    %v2580 = vunpack.c.l.b16 %v2384
    %v2581 = vunpack.c.l.b16 %v2385
    %v2582 = vunpack.c.l.b16 %v2386
    %v2583 = vunpack.c.l.b16 %v2387
    %v2584 = vunpack.c.l.b16 %v2388
    %v2585 = vunpack.c.l.b16 %v2389
    %v2586 = vunpack.c.l.b16 %v2390
    %v2587 = vunpack.c.l.b16 %v2391
    %v2588 = vunpack.c.l.b16 %v2392
    %v2589 = vunpack.c.l.b16 %v2393
    %v2590 = vunpack.c.l.b16 %v2394
    %v2591 = vunpack.c.l.b16 %v2395
    %v2592 = vunpack.c.l.b16 %v2396
    %v2593 = vunpack.c.l.b16 %v2397
    %v2594 = vunpack.c.l.b16 %v2398
    %v2595 = vunpack.c.l.b16 %v2399
    %v2596 = vunpack.c.l.b16 %v2400
    %v2597 = vunpack.c.l.b16 %v2401
    %v2598 = vunpack.c.l.b16 %v2402
    %v2599 = vunpack.c.l.b16 %v2403
    %v2600 = vunpack.c.l.b16 %v2404
    %v2601 = vunpack.c.l.b16 %v2405
    %v2602 = vunpack.c.l.b16 %v2406
    %v2603 = vunpack.c.l.b16 %v2407
    %v2604 = vunpack.c.l.b16 %v2408
    %v2605 = vunpack.c.l.b16 %v2409
    %v2606 = vunpack.c.l.b16 %v2410
    %v2607 = vunpack.c.l.b16 %v2411
    %v2608 = vunpack.c.l.b16 %v2412
    %v2609 = vunpack.c.l.b16 %v2413
    %v2610 = vunpack.c.l.b16 %v2414
    %v2611 = vunpack.c.l.b16 %v2415
    %v2612 = vunpack.c.l.b16 %v2416
    %v2613 = vunpack.c.l.b16 %v2417
    %v2614 = vunpack.c.l.b16 %v2418
    %v2615 = vunpack.c.l.b16 %v2419
    %v2616 = vunpack.c.l.b16 %v2420
    %v2617 = vunpack.c.l.b16 %v2421
    %v2618 = vunpack.c.l.b16 %v2422
    %v2619 = vunpack.c.l.b16 %v2423
    %v2620 = vunpack.c.l.b16 %v2424
    %v2621 = vunpack.c.l.b16 %v2425
    %v2622 = vunpack.c.l.b16 %v2426
    %v2623 = vunpack.c.l.b16 %v2427
    %v2624 = vunpack.c.l.b16 %v2428
    %v2625 = vunpack.c.l.b16 %v2429
    %v2626 = vunpack.c.l.b16 %v2430
    %v2627 = vunpack.c.l.b16 %v2431
    %v2628 = vunpack.c.l.b16 %v2432
    %v2629 = vunpack.c.l.b16 %v2433
    %v2630 = vunpack.c.l.b16 %v2434
    %v2631 = vunpack.c.l.b16 %v2435
    %v2632 = vunpack.c.l.b16 %v2436
    %v2633 = vunpack.c.l.b16 %v2437
    %v2634 = vunpack.c.l.b16 %v2438
    %v2635 = vunpack.c.l.b16 %v2439
    %v2636 = vpack.c.b16 %v2541, %v2540
    %v2637 = vpack.c.b16 %v2543, %v2542
    %v2638 = vpack.c.b16 %v2545, %v2544
    %v2639 = vpack.c.b16 %v2547, %v2546
    %v2640 = vpack.c.b16 %v2549, %v2548
    %v2641 = vpack.c.b16 %v2551, %v2550
    %v2642 = vpack.c.b16 %v2553, %v2552
    %v2643 = vpack.c.b16 %v2555, %v2554
    %v2644 = vpack.c.b16 %v2557, %v2556
    %v2645 = vpack.c.b16 %v2559, %v2558
    %v2646 = vpack.c.b16 %v2561, %v2560
    %v2647 = vpack.c.b16 %v2563, %v2562
    %v2648 = vpack.c.b16 %v2565, %v2564
    %v2649 = vpack.c.b16 %v2567, %v2566
    %v2650 = vpack.c.b16 %v2569, %v2568
    %v2651 = vpack.c.b16 %v2571, %v2570
    %v2652 = vpack.c.b16 %v2573, %v2572
    %v2653 = vpack.c.b16 %v2575, %v2574
    %v2654 = vpack.c.b16 %v2577, %v2576
    %v2655 = vpack.c.b16 %v2579, %v2578
    %v2656 = vpack.c.b16 %v2581, %v2580
    %v2657 = vpack.c.b16 %v2583, %v2582
    %v2658 = vpack.c.b16 %v2585, %v2584
    %v2659 = vpack.c.b16 %v2587, %v2586
    %v2660 = vpack.c.b16 %v2589, %v2588
    %v2661 = vpack.c.b16 %v2591, %v2590
    %v2662 = vpack.c.b16 %v2593, %v2592
    %v2663 = vpack.c.b16 %v2595, %v2594
    %v2664 = vpack.c.b16 %v2597, %v2596
    %v2665 = vpack.c.b16 %v2599, %v2598
    %v2666 = vpack.c.b16 %v2601, %v2600
    %v2667 = vpack.c.b16 %v2603, %v2602
    %v2668 = vpack.c.b16 %v2605, %v2604
    %v2669 = vpack.c.b16 %v2607, %v2606
    %v2670 = vpack.c.b16 %v2609, %v2608
    %v2671 = vpack.c.b16 %v2611, %v2610
    %v2672 = vpack.c.b16 %v2613, %v2612
    %v2673 = vpack.c.b16 %v2615, %v2614
    %v2674 = vpack.c.b16 %v2617, %v2616
    %v2675 = vpack.c.b16 %v2619, %v2618
    %v2676 = vpack.c.b16 %v2621, %v2620
    %v2677 = vpack.c.b16 %v2623, %v2622
    %v2678 = vpack.c.b16 %v2625, %v2624
    %v2679 = vpack.c.b16 %v2627, %v2626
    %v2680 = vpack.c.b16 %v2629, %v2628
    %v2681 = vpack.c.b16 %v2631, %v2630
    %v2682 = vpack.c.b16 %v2633, %v2632
    %v2683 = vpack.c.b16 %v2635, %v2634
    %2732 = vmatpush.bf16.msra.mxu0 %v2643
    %2733 = vmatpush.bf16.msra.mxu0 %v2642
    %2734 = vmatpush.bf16.msra.mxu0 %v2641
    %2735 = vmatpush.bf16.msra.mxu0 %v2640
    %2736 = vmatpush.bf16.msra.mxu0 %v2639
    %2737 = vmatpush.bf16.msra.mxu0 %v2638
    %2738 = vmatpush.bf16.msra.mxu0 %v2637
    %2739 = vmatpush.bf16.msra.mxu0 %v2636
    %2740 = vmatmul.bf16.gmra.mxu0 %v2338
    %v2741 = vpop.f32.mrf.mxu0
    %v2742 = vadd.f32 %v2442, %v2741
    %v2743 = vpop.f32.mrf.mxu0
    %2744 = vdwg.mxu0
    %2745 = vmatpush.bf16.msra.mxu0 %v2651
    %2746 = vmatpush.bf16.msra.mxu0 %v2650
    %2747 = vmatpush.bf16.msra.mxu0 %v2649
    %2748 = vmatpush.bf16.msra.mxu0 %v2648
    %2749 = vmatpush.bf16.msra.mxu0 %v2647
    %2750 = vmatpush.bf16.msra.mxu0 %v2646
    %2751 = vmatpush.bf16.msra.mxu0 %v2645
    %2752 = vmatpush.bf16.msra.mxu0 %v2644
    %2753 = vmatmul.bf16.gmra.mxu0 %v2339
    %v2754 = vpop.f32.mrf.mxu0
    %v2755 = vadd.f32 %v2742, %v2754
    %v2756 = vpop.f32.mrf.mxu0
    %2757 = vdwg.mxu0
    %2758 = vmatpush.bf16.msra.mxu0 %v2659
    %2759 = vmatpush.bf16.msra.mxu0 %v2658
    %2760 = vmatpush.bf16.msra.mxu0 %v2657
    %2761 = vmatpush.bf16.msra.mxu0 %v2656
    %2762 = vmatpush.bf16.msra.mxu0 %v2655
    %2763 = vmatpush.bf16.msra.mxu0 %v2654
    %2764 = vmatpush.bf16.msra.mxu0 %v2653
    %2765 = vmatpush.bf16.msra.mxu0 %v2652
    %2766 = vmatmul.bf16.gmra.mxu0 %v2340
    %v2767 = vpop.f32.mrf.mxu0
    %v2768 = vadd.f32 %v2755, %v2767
    %v2769 = vpop.f32.mrf.mxu0
    %2770 = vdwg.mxu0
    %2771 = vmatpush.bf16.msra.mxu0 %v2667
    %2772 = vmatpush.bf16.msra.mxu0 %v2666
    %2773 = vmatpush.bf16.msra.mxu0 %v2665
    %2774 = vmatpush.bf16.msra.mxu0 %v2664
    %2775 = vmatpush.bf16.msra.mxu0 %v2663
    %2776 = vmatpush.bf16.msra.mxu0 %v2662
    %2777 = vmatpush.bf16.msra.mxu0 %v2661
    %2778 = vmatpush.bf16.msra.mxu0 %v2660
    %2779 = vmatmul.bf16.gmra.mxu0 %v2341
    %v2780 = vpop.f32.mrf.mxu0
    %v2781 = vadd.f32 %v2768, %v2780
    %v2782 = vpop.f32.mrf.mxu0
    %2783 = vdwg.mxu0
    %2784 = vmatpush.bf16.msra.mxu0 %v2675
    %2785 = vmatpush.bf16.msra.mxu0 %v2674
    %2786 = vmatpush.bf16.msra.mxu0 %v2673
    %2787 = vmatpush.bf16.msra.mxu0 %v2672
    %2788 = vmatpush.bf16.msra.mxu0 %v2671
    %2789 = vmatpush.bf16.msra.mxu0 %v2670
    %2790 = vmatpush.bf16.msra.mxu0 %v2669
    %2791 = vmatpush.bf16.msra.mxu0 %v2668
    %2792 = vmatmul.bf16.gmra.mxu0 %v2342
    %v2793 = vpop.f32.mrf.mxu0
    %v2794 = vadd.f32 %v2781, %v2793
    %v2795 = vpop.f32.mrf.mxu0
    %2796 = vdwg.mxu0
    %2797 = vmatpush.bf16.msra.mxu0 %v2683
    %2798 = vmatpush.bf16.msra.mxu0 %v2682
    %2799 = vmatpush.bf16.msra.mxu0 %v2681
    %2800 = vmatpush.bf16.msra.mxu0 %v2680
    %2801 = vmatpush.bf16.msra.mxu0 %v2679
    %2802 = vmatpush.bf16.msra.mxu0 %v2678
    %2803 = vmatpush.bf16.msra.mxu0 %v2677
    %2804 = vmatpush.bf16.msra.mxu0 %v2676
    %2805 = vmatmul.bf16.gmra.mxu0 %v2343
    %v2806 = vpop.f32.mrf.mxu0
    %v2807 = vadd.f32 %v2794, %v2806
    %v2808 = vpop.f32.mrf.mxu0
    %2809 = vdwg.mxu0
    %2810 = vst [vmem:[#allocation13] sm:$0xff] %v2807
    // Predicated region
    $region50: #{tpu_custom_call.1} parent=1 // pred_check
      _
    $region51: #{tpu_custom_call.1} parent=1 // pred_check_branch
      %2812 = sbr.rel (0) target = $region53
    $region52: #{tpu_custom_call.1} parent=1 // pred_region
      %2814 = vsyncadd [#allocation4], 0
      %s2816 = sshll.u32 [#allocation13], 4
      %s2817 = int_to_ptr.vmem [resolvable:$true] %s2816
      %s2818 = sshll.u32 %s6, 4
      %s2819 = int_to_ptr.hbm [resolvable:$true] %s2818
      %2821 = dma.vmem_to_hbm [thread:$0]  %s2817, 128, %s2819, [#allocation4]
    $region53: #{tpu_custom_call.1} parent=1 // pred_fallthru
      _
    // Predicated region
    $region54: #{tpu_custom_call.1} parent=1 // pred_check
      _
    $region55: #{tpu_custom_call.1} parent=1 // pred_check_branch
      %2823 = sbr.rel (0) target = $region57
    $region56: #{tpu_custom_call.1} parent=1 // pred_region
      %2825 = dma.done [#allocation4], 128
    $region57: #{tpu_custom_call.1} parent=1 // pred_fallthru
      _
    %2826 = vsyncpa [#allocation3], 1
    %2827 = vsyncpa [#allocation6], 1
    %2828 = vsyncpa [#allocation9], 1
    %2829 = vsyncpa [#allocation12], 1
    %2830 = vsyncpa [#allocation4], 1

</llo_original>
